<compile_context>
chip_gen: v7x
topology: tpu7x:2x2x1
jax: 0.10.0
libtpu: 0.0.40
codegen_flags: <defaults>
</compile_context>

<pallas_src>
import functools

import jax
import jax.numpy as jnp
import numpy as np
from jax.experimental import pallas as pl
from jax.experimental.pallas import tpu as pltpu

EPSILON = 16.0 / 255.0
_VMEM_LIMIT_BYTES = 32 << 20          # <= physical VMEM on v5e/v6e/v7x


# ---------------------------------------------------------------------------
# Tile selection
# ---------------------------------------------------------------------------
def _pick_tm(B):
    """M tile: multiple of 8 dividing B (or B itself).  When B allows, leave
    >= 2 blocks on the parallel axis so both v7x TensorCores get work."""
    if B < 16 or B % 8:
        return B
    candidates = [t for t in range(8, min(B, 128) + 1, 8) if B % t == 0]
    multi = [t for t in candidates if B // t >= 2]
    return max(multi) if multi else max(candidates)


def _pick_tk(F, tm, D, *, max_tk=8192, bytes_budget=12 << 20):
    """Largest K tile that (a) divides F, (b) is 128/256-aligned, and (c) keeps
    the double-buffered bf16 image tile + f32 delta tile + bf16 W tile under
    the budget (budget < scoped VMEM defaults of 16 MiB v5e / 32 MiB v6e/v7x).
    At demo scale this returns tk == F -> single K step, whole-W resident."""
    def footprint(tk):
        # double-buffered inputs: images bf16, delta f32, W bf16
        return 2 * (tm * tk * 2 + tk * 4 + tk * D * 2)

    best = None
    for align in (256, 128):
        for cand in range(align, min(F, max_tk) + 1, align):
            if F % cand:
                continue
            if footprint(cand) <= bytes_budget:
                best = cand if best is None else max(best, cand)
        if best is not None:
            return best
    # No aligned divisor fits: tk == F is legal (block dim == full array dim)
    # but must not blow VMEM.
    if footprint(F) <= bytes_budget:
        return F
    raise ValueError(
        f"No VMEM-friendly K tile for F={F} (tm={tm}, D={D}); "
        "pad C*H*W to a multiple of 128.")


# ---------------------------------------------------------------------------
# Kernel 1: clean-image encoder  (tiled  x @ w' + b  ->  L2 normalize)
# computed ONCE per attack (the stop_gradient branch), hoisted out of the
# per-iteration PGD step.
# ---------------------------------------------------------------------------
def _encode_kernel(x_ref, w_ref, b_ref, feat_ref, acc_ref):
    k = pl.program_id(1)

    @pl.when(k == 0)
    def _():
        acc_ref[...] = jnp.zeros_like(acc_ref)

    # x and w are already bf16 in HBM/VMEM -> fed straight to the MXU,
    # accumulation stays f32.
    acc_ref[...] += jnp.dot(x_ref[...], w_ref[...],
                            preferred_element_type=jnp.float32)

    @pl.when(k == pl.num_programs(1) - 1)
    def _():
        feat = acc_ref[...] + b_ref[...]
        inv_norm = jax.lax.rsqrt(
            jnp.sum(feat * feat, axis=-1, keepdims=True) + 1e-12)
        feat_ref[...] = feat * inv_norm                   # normalize=True


def encode_clean(x_flat_bf16, w_folded_bf16, bias_f32, *, tm, tk):
    B, F = x_flat_bf16.shape
    D = w_folded_bf16.shape[1]
    return pl.pallas_call(
        _encode_kernel,
        out_shape=jax.ShapeDtypeStruct((B, D), jnp.float32),
        grid_spec=pltpu.PrefetchScalarGridSpec(
            num_scalar_prefetch=0,
            grid=(B // tm, F // tk),
            in_specs=[
                pl.BlockSpec((tm, tk), lambda i, k: (i, k)),   # images (bf16)
                pl.BlockSpec((tk, D), lambda i, k: (k, 0)),    # folded W (bf16)
                pl.BlockSpec((1, D), lambda i, k: (0, 0)),     # folded bias (f32)
            ],
            out_specs=pl.BlockSpec((tm, D), lambda i, k: (i, 0)),
            scratch_shapes=[pltpu.VMEM((tm, D), jnp.float32)],
        ),
        compiler_params=pltpu.CompilerParams(
            dimension_semantics=("parallel", "arbitrary"),
            vmem_limit_bytes=_VMEM_LIMIT_BYTES),
    )(x_flat_bf16, w_folded_bf16, bias_f32)


# ---------------------------------------------------------------------------
# Kernel 2: fused PGD forward step
#   per K-tile : d = clip(delta, -eps, eps); x_adv = clip(images + d, 0, 1)
#                acc += x_adv @ w'          (bf16 MXU, f32 accumulate)
#   finalize   : feat = L2norm(acc + b);  cos = sum(feat * x_feat, -1)
#   outputs    : only the (B, 1) cosine (adversarial features are not written
#                back to HBM -- they are unused by the forward loss).
# ---------------------------------------------------------------------------
def _adv_cos_kernel(images_ref, delta_ref, w_ref, b_ref, xfeat_ref,
                    cos_ref, acc_ref, *, epsilon):
    k = pl.program_id(1)

    @pl.when(k == 0)
    def _():
        acc_ref[...] = jnp.zeros_like(acc_ref)

    # perturbation math is pure VPU filler under the DMA/MXU work; done in f32
    # (v5e has no bf16 VALU), cast to bf16 only for the MXU.
    d = jnp.clip(delta_ref[...], -epsilon, epsilon)                  # f32
    x_adv = jnp.clip(images_ref[...].astype(jnp.float32) + d, 0.0, 1.0)
    acc_ref[...] += jnp.dot(x_adv.astype(jnp.bfloat16), w_ref[...],
                            preferred_element_type=jnp.float32)

    @pl.when(k == pl.num_programs(1) - 1)
    def _():
        feat = acc_ref[...] + b_ref[...]
        inv_norm = jax.lax.rsqrt(
            jnp.sum(feat * feat, axis=-1, keepdims=True) + 1e-12)
        featn = feat * inv_norm                                      # normalize=True
        # cosine vs. precomputed clean features, fused into the matmul epilogue
        cos_ref[...] = jnp.sum(featn * xfeat_ref[...], axis=-1, keepdims=True)


def pgd_forward_step(images_flat_bf16, delta_flat_f32, x_feat, w_folded_bf16,
                     bias_f32, epsilon, *, tm, tk):
    B, F = images_flat_bf16.shape
    D = w_folded_bf16.shape[1]
    kernel = functools.partial(_adv_cos_kernel, epsilon=float(epsilon))
    return pl.pallas_call(
        kernel,
        out_shape=jax.ShapeDtypeStruct((B, 1), jnp.float32),  # per-sample cosine
        grid_spec=pltpu.PrefetchScalarGridSpec(
            num_scalar_prefetch=0,
            grid=(B // tm, F // tk),
            in_specs=[
                pl.BlockSpec((tm, tk), lambda i, k: (i, k)),   # images (bf16)
                pl.BlockSpec((1, tk), lambda i, k: (0, k)),    # delta (f32, bcast)
                pl.BlockSpec((tk, D), lambda i, k: (k, 0)),    # folded W (bf16)
                pl.BlockSpec((1, D), lambda i, k: (0, 0)),     # folded bias (f32)
                pl.BlockSpec((tm, D), lambda i, k: (i, 0)),    # clean feats (f32)
            ],
            out_specs=pl.BlockSpec((tm, 1), lambda i, k: (i, 0)),
            scratch_shapes=[pltpu.VMEM((tm, D), jnp.float32)],
        ),
        compiler_params=pltpu.CompilerParams(
            dimension_semantics=("parallel", "arbitrary"),
            vmem_limit_bytes=_VMEM_LIMIT_BYTES),
    )(images_flat_bf16, delta_flat_f32, w_folded_bf16, bias_f32, x_feat)


# ---------------------------------------------------------------------------
# Forward pass (attack_type == 'untargeted')
# ---------------------------------------------------------------------------
def fold_normalization(chan_mean, chan_std, w, spatial):
    """Fold image_normalization into the static encoder weights (done once,
    outside any kernel / PGD loop): (x-mean)/std @ w  ==  x @ w' + b.
    W is stored bf16 (dominant HBM stream); bias stays f32 (tiny)."""
    invstd = 1.0 / chan_std
    mean_flat = jnp.repeat(chan_mean, spatial)             # [C*H*W]
    invstd_flat = jnp.repeat(invstd, spatial)              # [C*H*W]
    w_f32 = w.astype(jnp.float32)
    w_folded = (w_f32 * invstd_flat[:, None]).astype(jnp.bfloat16)
    bias = (-(mean_flat * invstd_flat) @ w_f32)[None, :].astype(jnp.float32)
    return w_folded, bias


def pgd_linfinity_forward(images, delta, chan_mean, chan_std, w, epsilon=EPSILON):
    """images: [B, 3, H, W] in [0, 1]; delta: [1, 3, H, W]."""
    B, C, H, W_sp = images.shape
    F = C * H * W_sp

    # DMA dtypes: images bf16 (re-streamed every PGD step), delta f32 (parameter).
    images_flat = images.reshape(B, F).astype(jnp.bfloat16)
    delta_flat = delta.reshape(1, F).astype(jnp.float32)

    tm = _pick_tm(B)
    tk = _pick_tk(F, tm, w.shape[1])

    # static precompute: fold the per-channel normalization into the weights
    w_folded, bias = fold_normalization(chan_mean, chan_std, w, H * W_sp)

    # clean-image features (torch.no_grad() branch) -- constant across PGD
    # steps; computed once here.  In a multi-step PGD loop, hoist this and
    # fold_normalization outside the loop; only pgd_forward_step runs per step.
    x_feat = jax.lax.stop_gradient(
        encode_clean(images_flat, w_folded, bias, tm=tm, tk=tk))

    cos = pgd_forward_step(images_flat, delta_flat, x_feat, w_folded, bias,
                           epsilon, tm=tm, tk=tk)

    cos_mean = jnp.mean(cos)
    return {"loss": cos_mean, "cos_loss": cos_mean}
    # TODO(synk): 'targeted'/'etu' branches and attack()'s bilinear
    # F.interpolate / torchvision RandomResizedCrop need the external CLIP
    # model / tokenizer / torchvision transforms.


# ---------------------------------------------------------------------------
# Pure-JAX reference mirroring the kernel's numerics (bf16 inputs / W, f32 math)
# ---------------------------------------------------------------------------
def _reference(images, delta, chan_mean, chan_std, w, epsilon=EPSILON):
    B, C, H, W_sp = images.shape
    F = C * H * W_sp
    x = images.reshape(B, F).astype(jnp.bfloat16)
    dl = delta.reshape(1, F).astype(jnp.float32)
    w_folded, bias = fold_normalization(chan_mean, chan_std, w, H * W_sp)
    wf = w_folded.astype(jnp.float32)

    def enc(xb):
        feat = xb.astype(jnp.float32) @ wf + bias
        return feat * jax.lax.rsqrt(
            jnp.sum(feat * feat, axis=-1, keepdims=True) + 1e-12)

    x_feat = enc(x)
    d = jnp.clip(dl, -epsilon, epsilon)
    x_adv = jnp.clip(x.astype(jnp.float32) + d, 0.0, 1.0).astype(jnp.bfloat16)
    adv_feat = enc(x_adv)
    return jnp.mean(jnp.sum(adv_feat * x_feat, axis=-1))


if __name__ == "__main__":
    B, C, H, W = 8, 3, 32, 32
    D = 256

    key = jax.random.PRNGKey(0)
    k_img, k_delta, k_w = jax.random.split(key, 3)

    images = jax.random.uniform(k_img, (B, C, H, W), jnp.float32, 0.0, 1.0)
    # module __init__: delta ~ Uniform(-eps, eps), shape (1, 3, image_size, image_size)
    delta = jax.random.uniform(k_delta, (1, C, H, W), jnp.float32, -EPSILON, EPSILON)
    # deterministic synthetic encoder weights and CLIP-style normalization constants
    w = jax.random.normal(k_w, (C * H * W, D), jnp.float32) * 0.02
    chan_mean = jnp.array([0.48145466, 0.4578275, 0.40821073], jnp.float32)
    chan_std = jnp.array([0.26862954, 0.26130258, 0.27577711], jnp.float32)

    out = pgd_linfinity_forward(images, delta, chan_mean, chan_std, w)
    jax.block_until_ready(out)

    assert out["loss"].shape == () and out["cos_loss"].shape == ()
    assert jnp.isfinite(out["loss"]) and jnp.isfinite(out["cos_loss"])

    ref = _reference(images, delta, chan_mean, chan_std, w)
    np.testing.assert_allclose(np.asarray(out["loss"]), np.asarray(ref),
                               rtol=0.0, atol=1e-2)
    print("KERNEL_OK")
</pallas_src>

<mosaic_0001>
module attributes {stable_mosaic.version = 11 : i64} {
  func.func @_encode_kernel(%arg0: i32, %arg1: i32, %arg2: memref<8x3072xbf16, #tpu.memory_space<vmem>>, %arg3: memref<3072x256xbf16, #tpu.memory_space<vmem>>, %arg4: memref<1x256xf32, #tpu.memory_space<vmem>>, %arg5: memref<8x256xf32, #tpu.memory_space<vmem>>, %arg6: memref<8x256xf32, #tpu.memory_space<vmem>>) attributes {dimension_semantics = [#tpu.dimension_semantics<parallel>, #tpu.dimension_semantics<arbitrary>], iteration_bounds = array<i64: 1, 1>, scalar_prefetch = 0 : i64, scratch_operands = 1 : i64, tpu.core_type = #tpu.core_type<tc>, window_params = [{transform_indices = @transform_0, window_bounds = array<i64: 8, 3072>}, {transform_indices = @transform_1, window_bounds = array<i64: 3072, 256>}, {pipeline_mode = #tpu.pipeline_mode<synchronous>, transform_indices = @transform_2, window_bounds = array<i64: 1, 256>}, {transform_indices = @transform_3, window_bounds = array<i64: 8, 256>}]} {
    %c0_i32 = arith.constant 0 : i32
    %0 = arith.cmpi eq, %arg1, %c0_i32 : i32
    %1 = arith.extui %0 : i1 to i32
    %c0_i32_0 = arith.constant 0 : i32
    %2 = arith.cmpi ne, %1, %c0_i32_0 : i32
    scf.if %2 {
      %cst_10 = arith.constant 0.000000e+00 : f32
      %12 = vector.broadcast %cst_10 : f32 to vector<8x256xf32>
      %c0_11 = arith.constant 0 : index
      %c0_12 = arith.constant 0 : index
      %13 = vector.load %arg6[%c0_11, %c0_12] : memref<8x256xf32, #tpu.memory_space<vmem>>, vector<8x256xf32>
      tpu.vector_store %arg6[%c0_11, %c0_12], %12 {strides = array<i32>} : memref<8x256xf32, #tpu.memory_space<vmem>>, vector<8x256xf32>,
    } else {
    }
    %c0 = arith.constant 0 : index
    %c0_1 = arith.constant 0 : index
    %3 = vector.load %arg6[%c0, %c0_1] : memref<8x256xf32, #tpu.memory_space<vmem>>, vector<8x256xf32>
    %c0_2 = arith.constant 0 : index
    %c0_3 = arith.constant 0 : index
    %4 = vector.load %arg2[%c0_2, %c0_3] : memref<8x3072xbf16, #tpu.memory_space<vmem>>, vector<8x3072xbf16>
    %c0_4 = arith.constant 0 : index
    %c0_5 = arith.constant 0 : index
    %5 = vector.load %arg3[%c0_4, %c0_5] : memref<3072x256xbf16, #tpu.memory_space<vmem>>, vector<3072x256xbf16>
    %cst = arith.constant dense<0.000000e+00> : vector<8x256xf32>
    %6 = tpu.matmul %4, %5, %cst {dimension_numbers = #tpu.dot_dimension_numbers<[1], [0], [0], [1], [0, 0, 1, 1], [], []>} : vector<8x3072xbf16>, vector<3072x256xbf16>, vector<8x256xf32> -> vector<8x256xf32>
    %7 = arith.addf %3, %6 : vector<8x256xf32>
    %c0_6 = arith.constant 0 : index
    %c0_7 = arith.constant 0 : index
    %8 = vector.load %arg6[%c0_6, %c0_7] : memref<8x256xf32, #tpu.memory_space<vmem>>, vector<8x256xf32>
    tpu.vector_store %arg6[%c0_6, %c0_7], %7 {strides = array<i32>} : memref<8x256xf32, #tpu.memory_space<vmem>>, vector<8x256xf32>,
    %c0_i32_8 = arith.constant 0 : i32
    %9 = arith.cmpi eq, %arg1, %c0_i32_8 : i32
    %10 = arith.extui %9 : i1 to i32
    %c0_i32_9 = arith.constant 0 : i32
    %11 = arith.cmpi ne, %10, %c0_i32_9 : i32
    scf.if %11 {
      %c0_10 = arith.constant 0 : index
      %c0_11 = arith.constant 0 : index
      %12 = vector.load %arg6[%c0_10, %c0_11] : memref<8x256xf32, #tpu.memory_space<vmem>>, vector<8x256xf32>
      %c0_12 = arith.constant 0 : index
      %c0_13 = arith.constant 0 : index
      %13 = vector.load %arg4[%c0_12, %c0_13] : memref<1x256xf32, #tpu.memory_space<vmem>>, vector<1x256xf32>
      %14 = vector.broadcast %13 : vector<1x256xf32> to vector<8x256xf32>
      %15 = arith.addf %12, %14 : vector<8x256xf32>
      %16 = arith.mulf %15, %15 : vector<8x256xf32>
      %cst_14 = arith.constant dense<0.000000e+00> : vector<8xf32>
      %17 = vector.multi_reduction <add>, %16, %cst_14 [1] : vector<8x256xf32> to vector<8xf32>
      %18 = vector.shape_cast %17 : vector<8xf32> to vector<8x1xf32>
      %cst_15 = arith.constant 9.99999996E-13 : f32
      %19 = vector.broadcast %cst_15 : f32 to vector<8x1xf32>
      %20 = arith.addf %18, %19 : vector<8x1xf32>
      %21 = math.rsqrt %20 : vector<8x1xf32>
      %22 = vector.broadcast %21 : vector<8x1xf32> to vector<8x256xf32>
      %23 = arith.mulf %15, %22 : vector<8x256xf32>
      %c0_16 = arith.constant 0 : index
      %c0_17 = arith.constant 0 : index
      %24 = vector.load %arg5[%c0_16, %c0_17] : memref<8x256xf32, #tpu.memory_space<vmem>>, vector<8x256xf32>
      tpu.vector_store %arg5[%c0_16, %c0_17], %23 {strides = array<i32>} : memref<8x256xf32, #tpu.memory_space<vmem>>, vector<8x256xf32>,
    } else {
    }
    return
  }
  func.func @transform_0(%arg0: i32, %arg1: i32) -> (i32, i32) {
    %c0_i32 = arith.constant 0 : i32
    return %arg0, %arg1 : i32, i32
  }
  func.func @transform_1(%arg0: i32, %arg1: i32) -> (i32, i32) {
    %c0_i32 = arith.constant 0 : i32
    %c0_i32_0 = arith.constant 0 : i32
    return %arg1, %c0_i32 : i32, i32
  }
  func.func @transform_2(%arg0: i32, %arg1: i32) -> (i32, i32) {
    %c0_i32 = arith.constant 0 : i32
    %c0_i32_0 = arith.constant 0 : i32
    %c0_i32_1 = arith.constant 0 : i32
    return %c0_i32, %c0_i32_0 : i32, i32
  }
  func.func @transform_3(%arg0: i32, %arg1: i32) -> (i32, i32) {
    %c0_i32 = arith.constant 0 : i32
    %c0_i32_0 = arith.constant 0 : i32
    return %arg0, %c0_i32 : i32, i32
  }
}

</mosaic_0001>

<llo_original>
// kernel: tpu_custom_call.1
$region0: #{tpu_custom_call.1}
  #allocation0 [shape = 'u32[]', space=smem, size = 0x4, offset = 0x4, fixed_abs, tag = 'smem constant byte address 0x4 - core index']
  #allocation1 [shape = 'u32[144,128]{1,0:T(1,128)}', space=vmem, size = 0x12000, scoped, tag = 'internal scratch']
  #allocation2 [shape = 'f32[8,256]{1,0:T(8,128)}', space=vmem, size = 0x2000, scoped, tag = 'scratch operand']
  %s0 = inlined_call_operand.hbm [shape: bf16[8,3072], index: 0, kind: input, shape index: {}]
  %s1 = inlined_call_operand.hbm [shape: bf16[3072,256], index: 1, kind: input, shape index: {}]
  %s2 = inlined_call_operand.hbm [shape: f32[1,256], index: 2, kind: input, shape index: {}]
  %s3 = inlined_call_operand.hbm [shape: f32[8,256], index: 3, kind: output, shape index: {}]
  %s4 = sld [smem:[#allocation0]]
  $region42: #{tpu_custom_call.1} parent=0
    _
  %s6 = ssub.s32 1, %s4
  %s7 = scalar_select 0, %s6, %s4
  $region1: #{tpu_custom_call.1} parent=0
    #allocation3 [shape = 'u8[49152]{0}', space=vmem, size = 0xc000, scoped, tag = 'input window, operand 0, single buffered']
    #allocation4 [shape = 's32[1]{0}', space=sflag, size = 0x4, scoped, tag = 'scoped memory for tpu_custom_call.1']
    #allocation5 [shape = 's32[1]{0}', space=sflag, size = 0x4, scoped, tag = 'scoped memory for tpu_custom_call.1']
    #allocation6 [shape = 'u8[1572864]{0}', space=vmem, size = 0x180000, scoped, tag = 'input window, operand 1, single buffered']
    #allocation7 [shape = 's32[1]{0}', space=sflag, size = 0x4, scoped, tag = 'scoped memory for tpu_custom_call.1']
    #allocation8 [shape = 'u8[1024]{0}', space=vmem, size = 0x400, scoped, tag = 'input window, operand 2, single buffered']
    #allocation9 [shape = 'u8[8192]{0}', space=vmem, size = 0x2000, scoped, tag = 'output window, operand 0, single buffered']
    %8 = vsyncpa [#allocation4], 0
    %9 = vsyncpa [#allocation7], 0
    %10 = vsyncpa [#allocation5], 0
    // Predicated region
    $region2: #{tpu_custom_call.1} parent=1 // pred_check
      _
    $region3: #{tpu_custom_call.1} parent=1 // pred_check_branch
      %12 = sbr.rel (0) target = $region5
    $region4: #{tpu_custom_call.1} parent=1 // pred_region
      %s14 = ssub.s32 1536, 1536
      %15 = vsyncadd [#allocation4], %s14
      %s17 = sshll.u32 [#allocation3], 4
      %s18 = int_to_ptr.vmem [resolvable:$true] %s17
      %20 = dma.hbm_to_vmem [thread:$0]  %s0, 1536, %s18, [#allocation4]
    $region5: #{tpu_custom_call.1} parent=1 // pred_fallthru
      _
    // Predicated region
    $region6: #{tpu_custom_call.1} parent=1 // pred_check
      _
    $region7: #{tpu_custom_call.1} parent=1 // pred_check_branch
      %22 = sbr.rel (0) target = $region9
    $region8: #{tpu_custom_call.1} parent=1 // pred_region
      %s24 = ssub.s32 49152, 49152
      %25 = vsyncadd [#allocation7], %s24
      %s26 = sshll.u32 [#allocation6], 4
      %s27 = int_to_ptr.vmem [resolvable:$true] %s26
      %32 = dma.hbm_to_vmem [thread:$0]  %s1, 49152, %s27, [#allocation7], 128, 128, 8
    $region9: #{tpu_custom_call.1} parent=1 // pred_fallthru
      _
    // Predicated region
    $region10: #{tpu_custom_call.1} parent=1 // pred_check
      _
    $region11: #{tpu_custom_call.1} parent=1 // pred_check_branch
      %34 = sbr.rel (0) target = $region13
    $region12: #{tpu_custom_call.1} parent=1 // pred_region
      %s36 = ssub.s32 32, 32
      %37 = vsyncadd [#allocation7], %s36
      %s39 = sshll.u32 [#allocation8], 4
      %s40 = int_to_ptr.vmem [resolvable:$true] %s39
      %42 = dma.hbm_to_vmem [thread:$0]  %s2, 32, %s40, [#allocation7]
    $region13: #{tpu_custom_call.1} parent=1 // pred_fallthru
      _
    // Predicated region
    $region14: #{tpu_custom_call.1} parent=1 // pred_check
      _
    $region15: #{tpu_custom_call.1} parent=1 // pred_check_branch
      %44 = sbr.rel (0) target = $region17
    $region16: #{tpu_custom_call.1} parent=1 // pred_region
      %45 = dma.done [#allocation4], 1536
    $region17: #{tpu_custom_call.1} parent=1 // pred_fallthru
      _
    // Predicated region
    $region18: #{tpu_custom_call.1} parent=1 // pred_check
      _
    $region19: #{tpu_custom_call.1} parent=1 // pred_check_branch
      %47 = sbr.rel (0) target = $region21
    $region20: #{tpu_custom_call.1} parent=1 // pred_region
      %48 = dma.done [#allocation7], 49152
    $region21: #{tpu_custom_call.1} parent=1 // pred_fallthru
      _
    // Predicated region
    $region22: #{tpu_custom_call.1} parent=1 // pred_check
      _
    $region23: #{tpu_custom_call.1} parent=1 // pred_check_branch
      %50 = sbr.rel (0) target = $region25
    $region24: #{tpu_custom_call.1} parent=1 // pred_region
      %51 = dma.done [#allocation7], 32
    $region25: #{tpu_custom_call.1} parent=1 // pred_fallthru
      _
    %p52 = scmp.eq.s32.totalorder 0, 0
    // Predicated region
    $region26: #{tpu_custom_call.1} parent=1 // pred_check
      %p53 = pneg %p52
    $region27: #{tpu_custom_call.1} parent=1 // pred_check_branch
      %55 = sbr.rel (%p53) target = $region29
    $region28: #{tpu_custom_call.1} parent=1 // pred_region
      %56 = vst [vmem:[#allocation2] sm:$0xff] 0.0
      %57 = vst [vmem:[#allocation2 + $0x8] sm:$0xff] 0.0
    $region29: #{tpu_custom_call.1} parent=1 // pred_fallthru
      _
    %v58 = vld [vmem:[#allocation2] sm:$0xff]
    %v59 = vld [vmem:[#allocation2 + $0x8] sm:$0xff]
    %v60 = vld [vmem:[#allocation3] sm:$0xff]
    %v61 = vld [vmem:[#allocation3 + $0x8] sm:$0xff]
    %v62 = vld [vmem:[#allocation3 + $0x10] sm:$0xff]
    %v63 = vld [vmem:[#allocation3 + $0x18] sm:$0xff]
    %v64 = vld [vmem:[#allocation3 + $0x20] sm:$0xff]
    %v65 = vld [vmem:[#allocation3 + $0x28] sm:$0xff]
    %v66 = vld [vmem:[#allocation3 + $0x30] sm:$0xff]
    %v67 = vld [vmem:[#allocation3 + $0x38] sm:$0xff]
    %v68 = vld [vmem:[#allocation3 + $0x40] sm:$0xff]
    %v69 = vld [vmem:[#allocation3 + $0x48] sm:$0xff]
    %v70 = vld [vmem:[#allocation3 + $0x50] sm:$0xff]
    %v71 = vld [vmem:[#allocation3 + $0x58] sm:$0xff]
    %v72 = vld [vmem:[#allocation6] sm:$0xff]
    %v73 = vld [vmem:[#allocation6 + $0x8] sm:$0xff]
    %v74 = vld [vmem:[#allocation6 + $0x10] sm:$0xff]
    %v75 = vld [vmem:[#allocation6 + $0x18] sm:$0xff]
    %v76 = vld [vmem:[#allocation6 + $0x20] sm:$0xff]
    %v77 = vld [vmem:[#allocation6 + $0x28] sm:$0xff]
    %v78 = vld [vmem:[#allocation6 + $0x30] sm:$0xff]
    %v79 = vld [vmem:[#allocation6 + $0x38] sm:$0xff]
    %v80 = vld [vmem:[#allocation6 + $0x40] sm:$0xff]
    %v81 = vld [vmem:[#allocation6 + $0x48] sm:$0xff]
    %v82 = vld [vmem:[#allocation6 + $0x50] sm:$0xff]
    %v83 = vld [vmem:[#allocation6 + $0x58] sm:$0xff]
    %v84 = vld [vmem:[#allocation6 + $0x60] sm:$0xff]
    %v85 = vld [vmem:[#allocation6 + $0x68] sm:$0xff]
    %v86 = vld [vmem:[#allocation6 + $0x70] sm:$0xff]
    %v87 = vld [vmem:[#allocation6 + $0x78] sm:$0xff]
    %v88 = vld [vmem:[#allocation6 + $0x80] sm:$0xff]
    %v89 = vld [vmem:[#allocation6 + $0x88] sm:$0xff]
    %v90 = vld [vmem:[#allocation6 + $0x90] sm:$0xff]
    %v91 = vld [vmem:[#allocation6 + $0x98] sm:$0xff]
    %v92 = vld [vmem:[#allocation6 + $0xa0] sm:$0xff]
    %v93 = vld [vmem:[#allocation6 + $0xa8] sm:$0xff]
    %v94 = vld [vmem:[#allocation6 + $0xb0] sm:$0xff]
    %v95 = vld [vmem:[#allocation6 + $0xb8] sm:$0xff]
    %v96 = vld [vmem:[#allocation6 + $0xc0] sm:$0xff]
    %v97 = vld [vmem:[#allocation6 + $0xc8] sm:$0xff]
    %v98 = vld [vmem:[#allocation6 + $0xd0] sm:$0xff]
    %v99 = vld [vmem:[#allocation6 + $0xd8] sm:$0xff]
    %v100 = vld [vmem:[#allocation6 + $0xe0] sm:$0xff]
    %v101 = vld [vmem:[#allocation6 + $0xe8] sm:$0xff]
    %v102 = vld [vmem:[#allocation6 + $0xf0] sm:$0xff]
    %v103 = vld [vmem:[#allocation6 + $0xf8] sm:$0xff]
    %v104 = vld [vmem:[#allocation6 + $0x100] sm:$0xff]
    %v105 = vld [vmem:[#allocation6 + $0x108] sm:$0xff]
    %v106 = vld [vmem:[#allocation6 + $0x110] sm:$0xff]
    %v107 = vld [vmem:[#allocation6 + $0x118] sm:$0xff]
    %v108 = vld [vmem:[#allocation6 + $0x120] sm:$0xff]
    %v109 = vld [vmem:[#allocation6 + $0x128] sm:$0xff]
    %v110 = vld [vmem:[#allocation6 + $0x130] sm:$0xff]
    %v111 = vld [vmem:[#allocation6 + $0x138] sm:$0xff]
    %v112 = vld [vmem:[#allocation6 + $0x140] sm:$0xff]
    %v113 = vld [vmem:[#allocation6 + $0x148] sm:$0xff]
    %v114 = vld [vmem:[#allocation6 + $0x150] sm:$0xff]
    %v115 = vld [vmem:[#allocation6 + $0x158] sm:$0xff]
    %v116 = vld [vmem:[#allocation6 + $0x160] sm:$0xff]
    %v117 = vld [vmem:[#allocation6 + $0x168] sm:$0xff]
    %v118 = vld [vmem:[#allocation6 + $0x170] sm:$0xff]
    %v119 = vld [vmem:[#allocation6 + $0x178] sm:$0xff]
    %v120 = vld [vmem:[#allocation6 + $0x180] sm:$0xff]
    %v121 = vld [vmem:[#allocation6 + $0x188] sm:$0xff]
    %v122 = vld [vmem:[#allocation6 + $0x190] sm:$0xff]
    %v123 = vld [vmem:[#allocation6 + $0x198] sm:$0xff]
    %v124 = vld [vmem:[#allocation6 + $0x1a0] sm:$0xff]
    %v125 = vld [vmem:[#allocation6 + $0x1a8] sm:$0xff]
    %v126 = vld [vmem:[#allocation6 + $0x1b0] sm:$0xff]
    %v127 = vld [vmem:[#allocation6 + $0x1b8] sm:$0xff]
    %v128 = vld [vmem:[#allocation6 + $0x1c0] sm:$0xff]
    %v129 = vld [vmem:[#allocation6 + $0x1c8] sm:$0xff]
    %v130 = vld [vmem:[#allocation6 + $0x1d0] sm:$0xff]
    %v131 = vld [vmem:[#allocation6 + $0x1d8] sm:$0xff]
    %v132 = vld [vmem:[#allocation6 + $0x1e0] sm:$0xff]
    %v133 = vld [vmem:[#allocation6 + $0x1e8] sm:$0xff]
    %v134 = vld [vmem:[#allocation6 + $0x1f0] sm:$0xff]
    %v135 = vld [vmem:[#allocation6 + $0x1f8] sm:$0xff]
    %v136 = vld [vmem:[#allocation6 + $0x200] sm:$0xff]
    %v137 = vld [vmem:[#allocation6 + $0x208] sm:$0xff]
    %v138 = vld [vmem:[#allocation6 + $0x210] sm:$0xff]
    %v139 = vld [vmem:[#allocation6 + $0x218] sm:$0xff]
    %v140 = vld [vmem:[#allocation6 + $0x220] sm:$0xff]
    %v141 = vld [vmem:[#allocation6 + $0x228] sm:$0xff]
    %v142 = vld [vmem:[#allocation6 + $0x230] sm:$0xff]
    %v143 = vld [vmem:[#allocation6 + $0x238] sm:$0xff]
    %v144 = vld [vmem:[#allocation6 + $0x240] sm:$0xff]
    %v145 = vld [vmem:[#allocation6 + $0x248] sm:$0xff]
    %v146 = vld [vmem:[#allocation6 + $0x250] sm:$0xff]
    %v147 = vld [vmem:[#allocation6 + $0x258] sm:$0xff]
    %v148 = vld [vmem:[#allocation6 + $0x260] sm:$0xff]
    %v149 = vld [vmem:[#allocation6 + $0x268] sm:$0xff]
    %v150 = vld [vmem:[#allocation6 + $0x270] sm:$0xff]
    %v151 = vld [vmem:[#allocation6 + $0x278] sm:$0xff]
    %v152 = vld [vmem:[#allocation6 + $0x280] sm:$0xff]
    %v153 = vld [vmem:[#allocation6 + $0x288] sm:$0xff]
    %v154 = vld [vmem:[#allocation6 + $0x290] sm:$0xff]
    %v155 = vld [vmem:[#allocation6 + $0x298] sm:$0xff]
    %v156 = vld [vmem:[#allocation6 + $0x2a0] sm:$0xff]
    %v157 = vld [vmem:[#allocation6 + $0x2a8] sm:$0xff]
    %v158 = vld [vmem:[#allocation6 + $0x2b0] sm:$0xff]
    %v159 = vld [vmem:[#allocation6 + $0x2b8] sm:$0xff]
    %v160 = vld [vmem:[#allocation6 + $0x2c0] sm:$0xff]
    %v161 = vld [vmem:[#allocation6 + $0x2c8] sm:$0xff]
    %v162 = vld [vmem:[#allocation6 + $0x2d0] sm:$0xff]
    %v163 = vld [vmem:[#allocation6 + $0x2d8] sm:$0xff]
    %v164 = vld [vmem:[#allocation6 + $0x2e0] sm:$0xff]
    %v165 = vld [vmem:[#allocation6 + $0x2e8] sm:$0xff]
    %v166 = vld [vmem:[#allocation6 + $0x2f0] sm:$0xff]
    %v167 = vld [vmem:[#allocation6 + $0x2f8] sm:$0xff]
    %v168 = vld [vmem:[#allocation6 + $0x300] sm:$0xff]
    %v169 = vld [vmem:[#allocation6 + $0x308] sm:$0xff]
    %v170 = vld [vmem:[#allocation6 + $0x310] sm:$0xff]
    %v171 = vld [vmem:[#allocation6 + $0x318] sm:$0xff]
    %v172 = vld [vmem:[#allocation6 + $0x320] sm:$0xff]
    %v173 = vld [vmem:[#allocation6 + $0x328] sm:$0xff]
    %v174 = vld [vmem:[#allocation6 + $0x330] sm:$0xff]
    %v175 = vld [vmem:[#allocation6 + $0x338] sm:$0xff]
    %v176 = vld [vmem:[#allocation6 + $0x340] sm:$0xff]
    %v177 = vld [vmem:[#allocation6 + $0x348] sm:$0xff]
    %v178 = vld [vmem:[#allocation6 + $0x350] sm:$0xff]
    %v179 = vld [vmem:[#allocation6 + $0x358] sm:$0xff]
    %v180 = vld [vmem:[#allocation6 + $0x360] sm:$0xff]
    %v181 = vld [vmem:[#allocation6 + $0x368] sm:$0xff]
    %v182 = vld [vmem:[#allocation6 + $0x370] sm:$0xff]
    %v183 = vld [vmem:[#allocation6 + $0x378] sm:$0xff]
    %v184 = vld [vmem:[#allocation6 + $0x380] sm:$0xff]
    %v185 = vld [vmem:[#allocation6 + $0x388] sm:$0xff]
    %v186 = vld [vmem:[#allocation6 + $0x390] sm:$0xff]
    %v187 = vld [vmem:[#allocation6 + $0x398] sm:$0xff]
    %v188 = vld [vmem:[#allocation6 + $0x3a0] sm:$0xff]
    %v189 = vld [vmem:[#allocation6 + $0x3a8] sm:$0xff]
    %v190 = vld [vmem:[#allocation6 + $0x3b0] sm:$0xff]
    %v191 = vld [vmem:[#allocation6 + $0x3b8] sm:$0xff]
    %v192 = vld [vmem:[#allocation6 + $0x3c0] sm:$0xff]
    %v193 = vld [vmem:[#allocation6 + $0x3c8] sm:$0xff]
    %v194 = vld [vmem:[#allocation6 + $0x3d0] sm:$0xff]
    %v195 = vld [vmem:[#allocation6 + $0x3d8] sm:$0xff]
    %v196 = vld [vmem:[#allocation6 + $0x3e0] sm:$0xff]
    %v197 = vld [vmem:[#allocation6 + $0x3e8] sm:$0xff]
    %v198 = vld [vmem:[#allocation6 + $0x3f0] sm:$0xff]
    %v199 = vld [vmem:[#allocation6 + $0x3f8] sm:$0xff]
    %v200 = vld [vmem:[#allocation6 + $0x400] sm:$0xff]
    %v201 = vld [vmem:[#allocation6 + $0x408] sm:$0xff]
    %v202 = vld [vmem:[#allocation6 + $0x410] sm:$0xff]
    %v203 = vld [vmem:[#allocation6 + $0x418] sm:$0xff]
    %v204 = vld [vmem:[#allocation6 + $0x420] sm:$0xff]
    %v205 = vld [vmem:[#allocation6 + $0x428] sm:$0xff]
    %v206 = vld [vmem:[#allocation6 + $0x430] sm:$0xff]
    %v207 = vld [vmem:[#allocation6 + $0x438] sm:$0xff]
    %v208 = vld [vmem:[#allocation6 + $0x440] sm:$0xff]
    %v209 = vld [vmem:[#allocation6 + $0x448] sm:$0xff]
    %v210 = vld [vmem:[#allocation6 + $0x450] sm:$0xff]
    %v211 = vld [vmem:[#allocation6 + $0x458] sm:$0xff]
    %v212 = vld [vmem:[#allocation6 + $0x460] sm:$0xff]
    %v213 = vld [vmem:[#allocation6 + $0x468] sm:$0xff]
    %v214 = vld [vmem:[#allocation6 + $0x470] sm:$0xff]
    %v215 = vld [vmem:[#allocation6 + $0x478] sm:$0xff]
    %v216 = vld [vmem:[#allocation6 + $0x480] sm:$0xff]
    %v217 = vld [vmem:[#allocation6 + $0x488] sm:$0xff]
    %v218 = vld [vmem:[#allocation6 + $0x490] sm:$0xff]
    %v219 = vld [vmem:[#allocation6 + $0x498] sm:$0xff]
    %v220 = vld [vmem:[#allocation6 + $0x4a0] sm:$0xff]
    %v221 = vld [vmem:[#allocation6 + $0x4a8] sm:$0xff]
    %v222 = vld [vmem:[#allocation6 + $0x4b0] sm:$0xff]
    %v223 = vld [vmem:[#allocation6 + $0x4b8] sm:$0xff]
    %v224 = vld [vmem:[#allocation6 + $0x4c0] sm:$0xff]
    %v225 = vld [vmem:[#allocation6 + $0x4c8] sm:$0xff]
    %v226 = vld [vmem:[#allocation6 + $0x4d0] sm:$0xff]
    %v227 = vld [vmem:[#allocation6 + $0x4d8] sm:$0xff]
    %v228 = vld [vmem:[#allocation6 + $0x4e0] sm:$0xff]
    %v229 = vld [vmem:[#allocation6 + $0x4e8] sm:$0xff]
    %v230 = vld [vmem:[#allocation6 + $0x4f0] sm:$0xff]
    %v231 = vld [vmem:[#allocation6 + $0x4f8] sm:$0xff]
    %v232 = vld [vmem:[#allocation6 + $0x500] sm:$0xff]
    %v233 = vld [vmem:[#allocation6 + $0x508] sm:$0xff]
    %v234 = vld [vmem:[#allocation6 + $0x510] sm:$0xff]
    %v235 = vld [vmem:[#allocation6 + $0x518] sm:$0xff]
    %v236 = vld [vmem:[#allocation6 + $0x520] sm:$0xff]
    %v237 = vld [vmem:[#allocation6 + $0x528] sm:$0xff]
    %v238 = vld [vmem:[#allocation6 + $0x530] sm:$0xff]
    %v239 = vld [vmem:[#allocation6 + $0x538] sm:$0xff]
    %v240 = vld [vmem:[#allocation6 + $0x540] sm:$0xff]
    %v241 = vld [vmem:[#allocation6 + $0x548] sm:$0xff]
    %v242 = vld [vmem:[#allocation6 + $0x550] sm:$0xff]
    %v243 = vld [vmem:[#allocation6 + $0x558] sm:$0xff]
    %v244 = vld [vmem:[#allocation6 + $0x560] sm:$0xff]
    %v245 = vld [vmem:[#allocation6 + $0x568] sm:$0xff]
    %v246 = vld [vmem:[#allocation6 + $0x570] sm:$0xff]
    %v247 = vld [vmem:[#allocation6 + $0x578] sm:$0xff]
    %v248 = vld [vmem:[#allocation6 + $0x580] sm:$0xff]
    %v249 = vld [vmem:[#allocation6 + $0x588] sm:$0xff]
    %v250 = vld [vmem:[#allocation6 + $0x590] sm:$0xff]
    %v251 = vld [vmem:[#allocation6 + $0x598] sm:$0xff]
    %v252 = vld [vmem:[#allocation6 + $0x5a0] sm:$0xff]
    %v253 = vld [vmem:[#allocation6 + $0x5a8] sm:$0xff]
    %v254 = vld [vmem:[#allocation6 + $0x5b0] sm:$0xff]
    %v255 = vld [vmem:[#allocation6 + $0x5b8] sm:$0xff]
    %v256 = vld [vmem:[#allocation6 + $0x5c0] sm:$0xff]
    %v257 = vld [vmem:[#allocation6 + $0x5c8] sm:$0xff]
    %v258 = vld [vmem:[#allocation6 + $0x5d0] sm:$0xff]
    %v259 = vld [vmem:[#allocation6 + $0x5d8] sm:$0xff]
    %v260 = vld [vmem:[#allocation6 + $0x5e0] sm:$0xff]
    %v261 = vld [vmem:[#allocation6 + $0x5e8] sm:$0xff]
    %v262 = vld [vmem:[#allocation6 + $0x5f0] sm:$0xff]
    %v263 = vld [vmem:[#allocation6 + $0x5f8] sm:$0xff]
    %v264 = vld [vmem:[#allocation6 + $0x600] sm:$0xff]
    %v265 = vld [vmem:[#allocation6 + $0x608] sm:$0xff]
    %v266 = vld [vmem:[#allocation6 + $0x610] sm:$0xff]
    %v267 = vld [vmem:[#allocation6 + $0x618] sm:$0xff]
    %v268 = vld [vmem:[#allocation6 + $0x620] sm:$0xff]
    %v269 = vld [vmem:[#allocation6 + $0x628] sm:$0xff]
    %v270 = vld [vmem:[#allocation6 + $0x630] sm:$0xff]
    %v271 = vld [vmem:[#allocation6 + $0x638] sm:$0xff]
    %v272 = vld [vmem:[#allocation6 + $0x640] sm:$0xff]
    %v273 = vld [vmem:[#allocation6 + $0x648] sm:$0xff]
    %v274 = vld [vmem:[#allocation6 + $0x650] sm:$0xff]
    %v275 = vld [vmem:[#allocation6 + $0x658] sm:$0xff]
    %v276 = vld [vmem:[#allocation6 + $0x660] sm:$0xff]
    %v277 = vld [vmem:[#allocation6 + $0x668] sm:$0xff]
    %v278 = vld [vmem:[#allocation6 + $0x670] sm:$0xff]
    %v279 = vld [vmem:[#allocation6 + $0x678] sm:$0xff]
    %v280 = vld [vmem:[#allocation6 + $0x680] sm:$0xff]
    %v281 = vld [vmem:[#allocation6 + $0x688] sm:$0xff]
    %v282 = vld [vmem:[#allocation6 + $0x690] sm:$0xff]
    %v283 = vld [vmem:[#allocation6 + $0x698] sm:$0xff]
    %v284 = vld [vmem:[#allocation6 + $0x6a0] sm:$0xff]
    %v285 = vld [vmem:[#allocation6 + $0x6a8] sm:$0xff]
    %v286 = vld [vmem:[#allocation6 + $0x6b0] sm:$0xff]
    %v287 = vld [vmem:[#allocation6 + $0x6b8] sm:$0xff]
    %v288 = vld [vmem:[#allocation6 + $0x6c0] sm:$0xff]
    %v289 = vld [vmem:[#allocation6 + $0x6c8] sm:$0xff]
    %v290 = vld [vmem:[#allocation6 + $0x6d0] sm:$0xff]
    %v291 = vld [vmem:[#allocation6 + $0x6d8] sm:$0xff]
    %v292 = vld [vmem:[#allocation6 + $0x6e0] sm:$0xff]
    %v293 = vld [vmem:[#allocation6 + $0x6e8] sm:$0xff]
    %v294 = vld [vmem:[#allocation6 + $0x6f0] sm:$0xff]
    %v295 = vld [vmem:[#allocation6 + $0x6f8] sm:$0xff]
    %v296 = vld [vmem:[#allocation6 + $0x700] sm:$0xff]
    %v297 = vld [vmem:[#allocation6 + $0x708] sm:$0xff]
    %v298 = vld [vmem:[#allocation6 + $0x710] sm:$0xff]
    %v299 = vld [vmem:[#allocation6 + $0x718] sm:$0xff]
    %v300 = vld [vmem:[#allocation6 + $0x720] sm:$0xff]
    %v301 = vld [vmem:[#allocation6 + $0x728] sm:$0xff]
    %v302 = vld [vmem:[#allocation6 + $0x730] sm:$0xff]
    %v303 = vld [vmem:[#allocation6 + $0x738] sm:$0xff]
    %v304 = vld [vmem:[#allocation6 + $0x740] sm:$0xff]
    %v305 = vld [vmem:[#allocation6 + $0x748] sm:$0xff]
    %v306 = vld [vmem:[#allocation6 + $0x750] sm:$0xff]
    %v307 = vld [vmem:[#allocation6 + $0x758] sm:$0xff]
    %v308 = vld [vmem:[#allocation6 + $0x760] sm:$0xff]
    %v309 = vld [vmem:[#allocation6 + $0x768] sm:$0xff]
    %v310 = vld [vmem:[#allocation6 + $0x770] sm:$0xff]
    %v311 = vld [vmem:[#allocation6 + $0x778] sm:$0xff]
    %v312 = vld [vmem:[#allocation6 + $0x780] sm:$0xff]
    %v313 = vld [vmem:[#allocation6 + $0x788] sm:$0xff]
    %v314 = vld [vmem:[#allocation6 + $0x790] sm:$0xff]
    %v315 = vld [vmem:[#allocation6 + $0x798] sm:$0xff]
    %v316 = vld [vmem:[#allocation6 + $0x7a0] sm:$0xff]
    %v317 = vld [vmem:[#allocation6 + $0x7a8] sm:$0xff]
    %v318 = vld [vmem:[#allocation6 + $0x7b0] sm:$0xff]
    %v319 = vld [vmem:[#allocation6 + $0x7b8] sm:$0xff]
    %v320 = vld [vmem:[#allocation6 + $0x7c0] sm:$0xff]
    %v321 = vld [vmem:[#allocation6 + $0x7c8] sm:$0xff]
    %v322 = vld [vmem:[#allocation6 + $0x7d0] sm:$0xff]
    %v323 = vld [vmem:[#allocation6 + $0x7d8] sm:$0xff]
    %v324 = vld [vmem:[#allocation6 + $0x7e0] sm:$0xff]
    %v325 = vld [vmem:[#allocation6 + $0x7e8] sm:$0xff]
    %v326 = vld [vmem:[#allocation6 + $0x7f0] sm:$0xff]
    %v327 = vld [vmem:[#allocation6 + $0x7f8] sm:$0xff]
    %v328 = vld [vmem:[#allocation6 + $0x800] sm:$0xff]
    %v329 = vld [vmem:[#allocation6 + $0x808] sm:$0xff]
    %v330 = vld [vmem:[#allocation6 + $0x810] sm:$0xff]
    %v331 = vld [vmem:[#allocation6 + $0x818] sm:$0xff]
    %v332 = vld [vmem:[#allocation6 + $0x820] sm:$0xff]
    %v333 = vld [vmem:[#allocation6 + $0x828] sm:$0xff]
    %v334 = vld [vmem:[#allocation6 + $0x830] sm:$0xff]
    %v335 = vld [vmem:[#allocation6 + $0x838] sm:$0xff]
    %v336 = vld [vmem:[#allocation6 + $0x840] sm:$0xff]
    %v337 = vld [vmem:[#allocation6 + $0x848] sm:$0xff]
    %v338 = vld [vmem:[#allocation6 + $0x850] sm:$0xff]
    %v339 = vld [vmem:[#allocation6 + $0x858] sm:$0xff]
    %v340 = vld [vmem:[#allocation6 + $0x860] sm:$0xff]
    %v341 = vld [vmem:[#allocation6 + $0x868] sm:$0xff]
    %v342 = vld [vmem:[#allocation6 + $0x870] sm:$0xff]
    %v343 = vld [vmem:[#allocation6 + $0x878] sm:$0xff]
    %v344 = vld [vmem:[#allocation6 + $0x880] sm:$0xff]
    %v345 = vld [vmem:[#allocation6 + $0x888] sm:$0xff]
    %v346 = vld [vmem:[#allocation6 + $0x890] sm:$0xff]
    %v347 = vld [vmem:[#allocation6 + $0x898] sm:$0xff]
    %v348 = vld [vmem:[#allocation6 + $0x8a0] sm:$0xff]
    %v349 = vld [vmem:[#allocation6 + $0x8a8] sm:$0xff]
    %v350 = vld [vmem:[#allocation6 + $0x8b0] sm:$0xff]
    %v351 = vld [vmem:[#allocation6 + $0x8b8] sm:$0xff]
    %v352 = vld [vmem:[#allocation6 + $0x8c0] sm:$0xff]
    %v353 = vld [vmem:[#allocation6 + $0x8c8] sm:$0xff]
    %v354 = vld [vmem:[#allocation6 + $0x8d0] sm:$0xff]
    %v355 = vld [vmem:[#allocation6 + $0x8d8] sm:$0xff]
    %v356 = vld [vmem:[#allocation6 + $0x8e0] sm:$0xff]
    %v357 = vld [vmem:[#allocation6 + $0x8e8] sm:$0xff]
    %v358 = vld [vmem:[#allocation6 + $0x8f0] sm:$0xff]
    %v359 = vld [vmem:[#allocation6 + $0x8f8] sm:$0xff]
    %v360 = vld [vmem:[#allocation6 + $0x900] sm:$0xff]
    %v361 = vld [vmem:[#allocation6 + $0x908] sm:$0xff]
    %v362 = vld [vmem:[#allocation6 + $0x910] sm:$0xff]
    %v363 = vld [vmem:[#allocation6 + $0x918] sm:$0xff]
    %v364 = vld [vmem:[#allocation6 + $0x920] sm:$0xff]
    %v365 = vld [vmem:[#allocation6 + $0x928] sm:$0xff]
    %v366 = vld [vmem:[#allocation6 + $0x930] sm:$0xff]
    %v367 = vld [vmem:[#allocation6 + $0x938] sm:$0xff]
    %v368 = vld [vmem:[#allocation6 + $0x940] sm:$0xff]
    %v369 = vld [vmem:[#allocation6 + $0x948] sm:$0xff]
    %v370 = vld [vmem:[#allocation6 + $0x950] sm:$0xff]
    %v371 = vld [vmem:[#allocation6 + $0x958] sm:$0xff]
    %v372 = vld [vmem:[#allocation6 + $0x960] sm:$0xff]
    %v373 = vld [vmem:[#allocation6 + $0x968] sm:$0xff]
    %v374 = vld [vmem:[#allocation6 + $0x970] sm:$0xff]
    %v375 = vld [vmem:[#allocation6 + $0x978] sm:$0xff]
    %v376 = vld [vmem:[#allocation6 + $0x980] sm:$0xff]
    %v377 = vld [vmem:[#allocation6 + $0x988] sm:$0xff]
    %v378 = vld [vmem:[#allocation6 + $0x990] sm:$0xff]
    %v379 = vld [vmem:[#allocation6 + $0x998] sm:$0xff]
    %v380 = vld [vmem:[#allocation6 + $0x9a0] sm:$0xff]
    %v381 = vld [vmem:[#allocation6 + $0x9a8] sm:$0xff]
    %v382 = vld [vmem:[#allocation6 + $0x9b0] sm:$0xff]
    %v383 = vld [vmem:[#allocation6 + $0x9b8] sm:$0xff]
    %v384 = vld [vmem:[#allocation6 + $0x9c0] sm:$0xff]
    %v385 = vld [vmem:[#allocation6 + $0x9c8] sm:$0xff]
    %v386 = vld [vmem:[#allocation6 + $0x9d0] sm:$0xff]
    %v387 = vld [vmem:[#allocation6 + $0x9d8] sm:$0xff]
    %v388 = vld [vmem:[#allocation6 + $0x9e0] sm:$0xff]
    %v389 = vld [vmem:[#allocation6 + $0x9e8] sm:$0xff]
    %v390 = vld [vmem:[#allocation6 + $0x9f0] sm:$0xff]
    %v391 = vld [vmem:[#allocation6 + $0x9f8] sm:$0xff]
    %v392 = vld [vmem:[#allocation6 + $0xa00] sm:$0xff]
    %v393 = vld [vmem:[#allocation6 + $0xa08] sm:$0xff]
    %v394 = vld [vmem:[#allocation6 + $0xa10] sm:$0xff]
    %v395 = vld [vmem:[#allocation6 + $0xa18] sm:$0xff]
    %v396 = vld [vmem:[#allocation6 + $0xa20] sm:$0xff]
    %v397 = vld [vmem:[#allocation6 + $0xa28] sm:$0xff]
    %v398 = vld [vmem:[#allocation6 + $0xa30] sm:$0xff]
    %v399 = vld [vmem:[#allocation6 + $0xa38] sm:$0xff]
    %v400 = vld [vmem:[#allocation6 + $0xa40] sm:$0xff]
    %v401 = vld [vmem:[#allocation6 + $0xa48] sm:$0xff]
    %v402 = vld [vmem:[#allocation6 + $0xa50] sm:$0xff]
    %v403 = vld [vmem:[#allocation6 + $0xa58] sm:$0xff]
    %v404 = vld [vmem:[#allocation6 + $0xa60] sm:$0xff]
    %v405 = vld [vmem:[#allocation6 + $0xa68] sm:$0xff]
    %v406 = vld [vmem:[#allocation6 + $0xa70] sm:$0xff]
    %v407 = vld [vmem:[#allocation6 + $0xa78] sm:$0xff]
    %v408 = vld [vmem:[#allocation6 + $0xa80] sm:$0xff]
    %v409 = vld [vmem:[#allocation6 + $0xa88] sm:$0xff]
    %v410 = vld [vmem:[#allocation6 + $0xa90] sm:$0xff]
    %v411 = vld [vmem:[#allocation6 + $0xa98] sm:$0xff]
    %v412 = vld [vmem:[#allocation6 + $0xaa0] sm:$0xff]
    %v413 = vld [vmem:[#allocation6 + $0xaa8] sm:$0xff]
    %v414 = vld [vmem:[#allocation6 + $0xab0] sm:$0xff]
    %v415 = vld [vmem:[#allocation6 + $0xab8] sm:$0xff]
    %v416 = vld [vmem:[#allocation6 + $0xac0] sm:$0xff]
    %v417 = vld [vmem:[#allocation6 + $0xac8] sm:$0xff]
    %v418 = vld [vmem:[#allocation6 + $0xad0] sm:$0xff]
    %v419 = vld [vmem:[#allocation6 + $0xad8] sm:$0xff]
    %v420 = vld [vmem:[#allocation6 + $0xae0] sm:$0xff]
    %v421 = vld [vmem:[#allocation6 + $0xae8] sm:$0xff]
    %v422 = vld [vmem:[#allocation6 + $0xaf0] sm:$0xff]
    %v423 = vld [vmem:[#allocation6 + $0xaf8] sm:$0xff]
    %v424 = vld [vmem:[#allocation6 + $0xb00] sm:$0xff]
    %v425 = vld [vmem:[#allocation6 + $0xb08] sm:$0xff]
    %v426 = vld [vmem:[#allocation6 + $0xb10] sm:$0xff]
    %v427 = vld [vmem:[#allocation6 + $0xb18] sm:$0xff]
    %v428 = vld [vmem:[#allocation6 + $0xb20] sm:$0xff]
    %v429 = vld [vmem:[#allocation6 + $0xb28] sm:$0xff]
    %v430 = vld [vmem:[#allocation6 + $0xb30] sm:$0xff]
    %v431 = vld [vmem:[#allocation6 + $0xb38] sm:$0xff]
    %v432 = vld [vmem:[#allocation6 + $0xb40] sm:$0xff]
    %v433 = vld [vmem:[#allocation6 + $0xb48] sm:$0xff]
    %v434 = vld [vmem:[#allocation6 + $0xb50] sm:$0xff]
    %v435 = vld [vmem:[#allocation6 + $0xb58] sm:$0xff]
    %v436 = vld [vmem:[#allocation6 + $0xb60] sm:$0xff]
    %v437 = vld [vmem:[#allocation6 + $0xb68] sm:$0xff]
    %v438 = vld [vmem:[#allocation6 + $0xb70] sm:$0xff]
    %v439 = vld [vmem:[#allocation6 + $0xb78] sm:$0xff]
    %v440 = vld [vmem:[#allocation6 + $0xb80] sm:$0xff]
    %v441 = vld [vmem:[#allocation6 + $0xb88] sm:$0xff]
    %v442 = vld [vmem:[#allocation6 + $0xb90] sm:$0xff]
    %v443 = vld [vmem:[#allocation6 + $0xb98] sm:$0xff]
    %v444 = vld [vmem:[#allocation6 + $0xba0] sm:$0xff]
    %v445 = vld [vmem:[#allocation6 + $0xba8] sm:$0xff]
    %v446 = vld [vmem:[#allocation6 + $0xbb0] sm:$0xff]
    %v447 = vld [vmem:[#allocation6 + $0xbb8] sm:$0xff]
    %v448 = vld [vmem:[#allocation6 + $0xbc0] sm:$0xff]
    %v449 = vld [vmem:[#allocation6 + $0xbc8] sm:$0xff]
    %v450 = vld [vmem:[#allocation6 + $0xbd0] sm:$0xff]
    %v451 = vld [vmem:[#allocation6 + $0xbd8] sm:$0xff]
    %v452 = vld [vmem:[#allocation6 + $0xbe0] sm:$0xff]
    %v453 = vld [vmem:[#allocation6 + $0xbe8] sm:$0xff]
    %v454 = vld [vmem:[#allocation6 + $0xbf0] sm:$0xff]
    %v455 = vld [vmem:[#allocation6 + $0xbf8] sm:$0xff]
    %v468 = vunpack.c.l.b16 %v60
    %v469 = vunpack.c.h.b16 %v60
    %v470 = vunpack.c.l.b16 %v61
    %v471 = vunpack.c.h.b16 %v61
    %v472 = vunpack.c.l.b16 %v62
    %v473 = vunpack.c.h.b16 %v62
    %v474 = vunpack.c.l.b16 %v63
    %v475 = vunpack.c.h.b16 %v63
    %v476 = vunpack.c.l.b16 %v64
    %v477 = vunpack.c.h.b16 %v64
    %v478 = vunpack.c.l.b16 %v65
    %v479 = vunpack.c.h.b16 %v65
    %v480 = vunpack.c.l.b16 %v66
    %v481 = vunpack.c.h.b16 %v66
    %v482 = vunpack.c.l.b16 %v67
    %v483 = vunpack.c.h.b16 %v67
    %v484 = vunpack.c.l.b16 %v68
    %v485 = vunpack.c.h.b16 %v68
    %v486 = vunpack.c.l.b16 %v69
    %v487 = vunpack.c.h.b16 %v69
    %v488 = vunpack.c.l.b16 %v70
    %v489 = vunpack.c.h.b16 %v70
    %v490 = vunpack.c.l.b16 %v71
    %v491 = vunpack.c.h.b16 %v71
    %v492 = vpack.c.b16 %v468, %v468
    %v493 = vpack.c.b16 %v469, %v469
    %v494 = vpack.c.b16 %v470, %v470
    %v495 = vpack.c.b16 %v471, %v471
    %v496 = vpack.c.b16 %v472, %v472
    %v497 = vpack.c.b16 %v473, %v473
    %v498 = vpack.c.b16 %v474, %v474
    %v499 = vpack.c.b16 %v475, %v475
    %v500 = vpack.c.b16 %v476, %v476
    %v501 = vpack.c.b16 %v477, %v477
    %v502 = vpack.c.b16 %v478, %v478
    %v503 = vpack.c.b16 %v479, %v479
    %v504 = vpack.c.b16 %v480, %v480
    %v505 = vpack.c.b16 %v481, %v481
    %v506 = vpack.c.b16 %v482, %v482
    %v507 = vpack.c.b16 %v483, %v483
    %v508 = vpack.c.b16 %v484, %v484
    %v509 = vpack.c.b16 %v485, %v485
    %v510 = vpack.c.b16 %v486, %v486
    %v511 = vpack.c.b16 %v487, %v487
    %v512 = vpack.c.b16 %v488, %v488
    %v513 = vpack.c.b16 %v489, %v489
    %v514 = vpack.c.b16 %v490, %v490
    %v515 = vpack.c.b16 %v491, %v491
    %v924 = vunpack.c.l.b16 %v72
    %v925 = vunpack.c.h.b16 %v72
    %v926 = vunpack.c.l.b16 %v73
    %v927 = vunpack.c.h.b16 %v73
    %v928 = vunpack.c.l.b16 %v74
    %v929 = vunpack.c.h.b16 %v74
    %v930 = vunpack.c.l.b16 %v75
    %v931 = vunpack.c.h.b16 %v75
    %v932 = vunpack.c.l.b16 %v76
    %v933 = vunpack.c.h.b16 %v76
    %v934 = vunpack.c.l.b16 %v77
    %v935 = vunpack.c.h.b16 %v77
    %v936 = vunpack.c.l.b16 %v78
    %v937 = vunpack.c.h.b16 %v78
    %v938 = vunpack.c.l.b16 %v79
    %v939 = vunpack.c.h.b16 %v79
    %v940 = vunpack.c.l.b16 %v80
    %v941 = vunpack.c.h.b16 %v80
    %v942 = vunpack.c.l.b16 %v81
    %v943 = vunpack.c.h.b16 %v81
    %v944 = vunpack.c.l.b16 %v82
    %v945 = vunpack.c.h.b16 %v82
    %v946 = vunpack.c.l.b16 %v83
    %v947 = vunpack.c.h.b16 %v83
    %v948 = vunpack.c.l.b16 %v84
    %v949 = vunpack.c.h.b16 %v84
    %v950 = vunpack.c.l.b16 %v85
    %v951 = vunpack.c.h.b16 %v85
    %v952 = vunpack.c.l.b16 %v86
    %v953 = vunpack.c.h.b16 %v86
    %v954 = vunpack.c.l.b16 %v87
    %v955 = vunpack.c.h.b16 %v87
    %v956 = vunpack.c.l.b16 %v88
    %v957 = vunpack.c.h.b16 %v88
    %v958 = vunpack.c.l.b16 %v89
    %v959 = vunpack.c.h.b16 %v89
    %v960 = vunpack.c.l.b16 %v90
    %v961 = vunpack.c.h.b16 %v90
    %v962 = vunpack.c.l.b16 %v91
    %v963 = vunpack.c.h.b16 %v91
    %v964 = vunpack.c.l.b16 %v92
    %v965 = vunpack.c.h.b16 %v92
    %v966 = vunpack.c.l.b16 %v93
    %v967 = vunpack.c.h.b16 %v93
    %v968 = vunpack.c.l.b16 %v94
    %v969 = vunpack.c.h.b16 %v94
    %v970 = vunpack.c.l.b16 %v95
    %v971 = vunpack.c.h.b16 %v95
    %v972 = vunpack.c.l.b16 %v96
    %v973 = vunpack.c.h.b16 %v96
    %v974 = vunpack.c.l.b16 %v97
    %v975 = vunpack.c.h.b16 %v97
    %v976 = vunpack.c.l.b16 %v98
    %v977 = vunpack.c.h.b16 %v98
    %v978 = vunpack.c.l.b16 %v99
    %v979 = vunpack.c.h.b16 %v99
    %v980 = vunpack.c.l.b16 %v100
    %v981 = vunpack.c.h.b16 %v100
    %v982 = vunpack.c.l.b16 %v101
    %v983 = vunpack.c.h.b16 %v101
    %v984 = vunpack.c.l.b16 %v102
    %v985 = vunpack.c.h.b16 %v102
    %v986 = vunpack.c.l.b16 %v103
    %v987 = vunpack.c.h.b16 %v103
    %v988 = vunpack.c.l.b16 %v104
    %v989 = vunpack.c.h.b16 %v104
    %v990 = vunpack.c.l.b16 %v105
    %v991 = vunpack.c.h.b16 %v105
    %v992 = vunpack.c.l.b16 %v106
    %v993 = vunpack.c.h.b16 %v106
    %v994 = vunpack.c.l.b16 %v107
    %v995 = vunpack.c.h.b16 %v107
    %v996 = vunpack.c.l.b16 %v108
    %v997 = vunpack.c.h.b16 %v108
    %v998 = vunpack.c.l.b16 %v109
    %v999 = vunpack.c.h.b16 %v109
    %v1000 = vunpack.c.l.b16 %v110
    %v1001 = vunpack.c.h.b16 %v110
    %v1002 = vunpack.c.l.b16 %v111
    %v1003 = vunpack.c.h.b16 %v111
    %v1004 = vunpack.c.l.b16 %v112
    %v1005 = vunpack.c.h.b16 %v112
    %v1006 = vunpack.c.l.b16 %v113
    %v1007 = vunpack.c.h.b16 %v113
    %v1008 = vunpack.c.l.b16 %v114
    %v1009 = vunpack.c.h.b16 %v114
    %v1010 = vunpack.c.l.b16 %v115
    %v1011 = vunpack.c.h.b16 %v115
    %v1012 = vunpack.c.l.b16 %v116
    %v1013 = vunpack.c.h.b16 %v116
    %v1014 = vunpack.c.l.b16 %v117
    %v1015 = vunpack.c.h.b16 %v117
    %v1016 = vunpack.c.l.b16 %v118
    %v1017 = vunpack.c.h.b16 %v118
    %v1018 = vunpack.c.l.b16 %v119
    %v1019 = vunpack.c.h.b16 %v119
    %v1020 = vunpack.c.l.b16 %v120
    %v1021 = vunpack.c.h.b16 %v120
    %v1022 = vunpack.c.l.b16 %v121
    %v1023 = vunpack.c.h.b16 %v121
    %v1024 = vunpack.c.l.b16 %v122
    %v1025 = vunpack.c.h.b16 %v122
    %v1026 = vunpack.c.l.b16 %v123
    %v1027 = vunpack.c.h.b16 %v123
    %v1028 = vunpack.c.l.b16 %v124
    %v1029 = vunpack.c.h.b16 %v124
    %v1030 = vunpack.c.l.b16 %v125
    %v1031 = vunpack.c.h.b16 %v125
    %v1032 = vunpack.c.l.b16 %v126
    %v1033 = vunpack.c.h.b16 %v126
    %v1034 = vunpack.c.l.b16 %v127
    %v1035 = vunpack.c.h.b16 %v127
    %v1036 = vunpack.c.l.b16 %v128
    %v1037 = vunpack.c.h.b16 %v128
    %v1038 = vunpack.c.l.b16 %v129
    %v1039 = vunpack.c.h.b16 %v129
    %v1040 = vunpack.c.l.b16 %v130
    %v1041 = vunpack.c.h.b16 %v130
    %v1042 = vunpack.c.l.b16 %v131
    %v1043 = vunpack.c.h.b16 %v131
    %v1044 = vunpack.c.l.b16 %v132
    %v1045 = vunpack.c.h.b16 %v132
    %v1046 = vunpack.c.l.b16 %v133
    %v1047 = vunpack.c.h.b16 %v133
    %v1048 = vunpack.c.l.b16 %v134
    %v1049 = vunpack.c.h.b16 %v134
    %v1050 = vunpack.c.l.b16 %v135
    %v1051 = vunpack.c.h.b16 %v135
    %v1052 = vunpack.c.l.b16 %v136
    %v1053 = vunpack.c.h.b16 %v136
    %v1054 = vunpack.c.l.b16 %v137
    %v1055 = vunpack.c.h.b16 %v137
    %v1056 = vunpack.c.l.b16 %v138
    %v1057 = vunpack.c.h.b16 %v138
    %v1058 = vunpack.c.l.b16 %v139
    %v1059 = vunpack.c.h.b16 %v139
    %v1060 = vunpack.c.l.b16 %v140
    %v1061 = vunpack.c.h.b16 %v140
    %v1062 = vunpack.c.l.b16 %v141
    %v1063 = vunpack.c.h.b16 %v141
    %v1064 = vunpack.c.l.b16 %v142
    %v1065 = vunpack.c.h.b16 %v142
    %v1066 = vunpack.c.l.b16 %v143
    %v1067 = vunpack.c.h.b16 %v143
    %v1068 = vunpack.c.l.b16 %v144
    %v1069 = vunpack.c.h.b16 %v144
    %v1070 = vunpack.c.l.b16 %v145
    %v1071 = vunpack.c.h.b16 %v145
    %v1072 = vunpack.c.l.b16 %v146
    %v1073 = vunpack.c.h.b16 %v146
    %v1074 = vunpack.c.l.b16 %v147
    %v1075 = vunpack.c.h.b16 %v147
    %v1076 = vunpack.c.l.b16 %v148
    %v1077 = vunpack.c.h.b16 %v148
    %v1078 = vunpack.c.l.b16 %v149
    %v1079 = vunpack.c.h.b16 %v149
    %v1080 = vunpack.c.l.b16 %v150
    %v1081 = vunpack.c.h.b16 %v150
    %v1082 = vunpack.c.l.b16 %v151
    %v1083 = vunpack.c.h.b16 %v151
    %v1084 = vunpack.c.l.b16 %v152
    %v1085 = vunpack.c.h.b16 %v152
    %v1086 = vunpack.c.l.b16 %v153
    %v1087 = vunpack.c.h.b16 %v153
    %v1088 = vunpack.c.l.b16 %v154
    %v1089 = vunpack.c.h.b16 %v154
    %v1090 = vunpack.c.l.b16 %v155
    %v1091 = vunpack.c.h.b16 %v155
    %v1092 = vunpack.c.l.b16 %v156
    %v1093 = vunpack.c.h.b16 %v156
    %v1094 = vunpack.c.l.b16 %v157
    %v1095 = vunpack.c.h.b16 %v157
    %v1096 = vunpack.c.l.b16 %v158
    %v1097 = vunpack.c.h.b16 %v158
    %v1098 = vunpack.c.l.b16 %v159
    %v1099 = vunpack.c.h.b16 %v159
    %v1100 = vunpack.c.l.b16 %v160
    %v1101 = vunpack.c.h.b16 %v160
    %v1102 = vunpack.c.l.b16 %v161
    %v1103 = vunpack.c.h.b16 %v161
    %v1104 = vunpack.c.l.b16 %v162
    %v1105 = vunpack.c.h.b16 %v162
    %v1106 = vunpack.c.l.b16 %v163
    %v1107 = vunpack.c.h.b16 %v163
    %v1108 = vunpack.c.l.b16 %v164
    %v1109 = vunpack.c.h.b16 %v164
    %v1110 = vunpack.c.l.b16 %v165
    %v1111 = vunpack.c.h.b16 %v165
    %v1112 = vunpack.c.l.b16 %v166
    %v1113 = vunpack.c.h.b16 %v166
    %v1114 = vunpack.c.l.b16 %v167
    %v1115 = vunpack.c.h.b16 %v167
    %v1116 = vunpack.c.l.b16 %v168
    %v1117 = vunpack.c.h.b16 %v168
    %v1118 = vunpack.c.l.b16 %v169
    %v1119 = vunpack.c.h.b16 %v169
    %v1120 = vunpack.c.l.b16 %v170
    %v1121 = vunpack.c.h.b16 %v170
    %v1122 = vunpack.c.l.b16 %v171
    %v1123 = vunpack.c.h.b16 %v171
    %v1124 = vunpack.c.l.b16 %v172
    %v1125 = vunpack.c.h.b16 %v172
    %v1126 = vunpack.c.l.b16 %v173
    %v1127 = vunpack.c.h.b16 %v173
    %v1128 = vunpack.c.l.b16 %v174
    %v1129 = vunpack.c.h.b16 %v174
    %v1130 = vunpack.c.l.b16 %v175
    %v1131 = vunpack.c.h.b16 %v175
    %v1132 = vunpack.c.l.b16 %v176
    %v1133 = vunpack.c.h.b16 %v176
    %v1134 = vunpack.c.l.b16 %v177
    %v1135 = vunpack.c.h.b16 %v177
    %v1136 = vunpack.c.l.b16 %v178
    %v1137 = vunpack.c.h.b16 %v178
    %v1138 = vunpack.c.l.b16 %v179
    %v1139 = vunpack.c.h.b16 %v179
    %v1140 = vunpack.c.l.b16 %v180
    %v1141 = vunpack.c.h.b16 %v180
    %v1142 = vunpack.c.l.b16 %v181
    %v1143 = vunpack.c.h.b16 %v181
    %v1144 = vunpack.c.l.b16 %v182
    %v1145 = vunpack.c.h.b16 %v182
    %v1146 = vunpack.c.l.b16 %v183
    %v1147 = vunpack.c.h.b16 %v183
    %v1148 = vunpack.c.l.b16 %v184
    %v1149 = vunpack.c.h.b16 %v184
    %v1150 = vunpack.c.l.b16 %v185
    %v1151 = vunpack.c.h.b16 %v185
    %v1152 = vunpack.c.l.b16 %v186
    %v1153 = vunpack.c.h.b16 %v186
    %v1154 = vunpack.c.l.b16 %v187
    %v1155 = vunpack.c.h.b16 %v187
    %v1156 = vunpack.c.l.b16 %v188
    %v1157 = vunpack.c.h.b16 %v188
    %v1158 = vunpack.c.l.b16 %v189
    %v1159 = vunpack.c.h.b16 %v189
    %v1160 = vunpack.c.l.b16 %v190
    %v1161 = vunpack.c.h.b16 %v190
    %v1162 = vunpack.c.l.b16 %v191
    %v1163 = vunpack.c.h.b16 %v191
    %v1164 = vunpack.c.l.b16 %v192
    %v1165 = vunpack.c.h.b16 %v192
    %v1166 = vunpack.c.l.b16 %v193
    %v1167 = vunpack.c.h.b16 %v193
    %v1168 = vunpack.c.l.b16 %v194
    %v1169 = vunpack.c.h.b16 %v194
    %v1170 = vunpack.c.l.b16 %v195
    %v1171 = vunpack.c.h.b16 %v195
    %v1172 = vunpack.c.l.b16 %v196
    %v1173 = vunpack.c.h.b16 %v196
    %v1174 = vunpack.c.l.b16 %v197
    %v1175 = vunpack.c.h.b16 %v197
    %v1176 = vunpack.c.l.b16 %v198
    %v1177 = vunpack.c.h.b16 %v198
    %v1178 = vunpack.c.l.b16 %v199
    %v1179 = vunpack.c.h.b16 %v199
    %v1180 = vunpack.c.l.b16 %v200
    %v1181 = vunpack.c.h.b16 %v200
    %v1182 = vunpack.c.l.b16 %v201
    %v1183 = vunpack.c.h.b16 %v201
    %v1184 = vunpack.c.l.b16 %v202
    %v1185 = vunpack.c.h.b16 %v202
    %v1186 = vunpack.c.l.b16 %v203
    %v1187 = vunpack.c.h.b16 %v203
    %v1188 = vunpack.c.l.b16 %v204
    %v1189 = vunpack.c.h.b16 %v204
    %v1190 = vunpack.c.l.b16 %v205
    %v1191 = vunpack.c.h.b16 %v205
    %v1192 = vunpack.c.l.b16 %v206
    %v1193 = vunpack.c.h.b16 %v206
    %v1194 = vunpack.c.l.b16 %v207
    %v1195 = vunpack.c.h.b16 %v207
    %v1196 = vunpack.c.l.b16 %v208
    %v1197 = vunpack.c.h.b16 %v208
    %v1198 = vunpack.c.l.b16 %v209
    %v1199 = vunpack.c.h.b16 %v209
    %v1200 = vunpack.c.l.b16 %v210
    %v1201 = vunpack.c.h.b16 %v210
    %v1202 = vunpack.c.l.b16 %v211
    %v1203 = vunpack.c.h.b16 %v211
    %v1204 = vunpack.c.l.b16 %v212
    %v1205 = vunpack.c.h.b16 %v212
    %v1206 = vunpack.c.l.b16 %v213
    %v1207 = vunpack.c.h.b16 %v213
    %v1208 = vunpack.c.l.b16 %v214
    %v1209 = vunpack.c.h.b16 %v214
    %v1210 = vunpack.c.l.b16 %v215
    %v1211 = vunpack.c.h.b16 %v215
    %v1212 = vunpack.c.l.b16 %v216
    %v1213 = vunpack.c.h.b16 %v216
    %v1214 = vunpack.c.l.b16 %v217
    %v1215 = vunpack.c.h.b16 %v217
    %v1216 = vunpack.c.l.b16 %v218
    %v1217 = vunpack.c.h.b16 %v218
    %v1218 = vunpack.c.l.b16 %v219
    %v1219 = vunpack.c.h.b16 %v219
    %v1220 = vunpack.c.l.b16 %v220
    %v1221 = vunpack.c.h.b16 %v220
    %v1222 = vunpack.c.l.b16 %v221
    %v1223 = vunpack.c.h.b16 %v221
    %v1224 = vunpack.c.l.b16 %v222
    %v1225 = vunpack.c.h.b16 %v222
    %v1226 = vunpack.c.l.b16 %v223
    %v1227 = vunpack.c.h.b16 %v223
    %v1228 = vunpack.c.l.b16 %v224
    %v1229 = vunpack.c.h.b16 %v224
    %v1230 = vunpack.c.l.b16 %v225
    %v1231 = vunpack.c.h.b16 %v225
    %v1232 = vunpack.c.l.b16 %v226
    %v1233 = vunpack.c.h.b16 %v226
    %v1234 = vunpack.c.l.b16 %v227
    %v1235 = vunpack.c.h.b16 %v227
    %v1236 = vunpack.c.l.b16 %v228
    %v1237 = vunpack.c.h.b16 %v228
    %v1238 = vunpack.c.l.b16 %v229
    %v1239 = vunpack.c.h.b16 %v229
    %v1240 = vunpack.c.l.b16 %v230
    %v1241 = vunpack.c.h.b16 %v230
    %v1242 = vunpack.c.l.b16 %v231
    %v1243 = vunpack.c.h.b16 %v231
    %v1244 = vunpack.c.l.b16 %v232
    %v1245 = vunpack.c.h.b16 %v232
    %v1246 = vunpack.c.l.b16 %v233
    %v1247 = vunpack.c.h.b16 %v233
    %v1248 = vunpack.c.l.b16 %v234
    %v1249 = vunpack.c.h.b16 %v234
    %v1250 = vunpack.c.l.b16 %v235
    %v1251 = vunpack.c.h.b16 %v235
    %v1252 = vunpack.c.l.b16 %v236
    %v1253 = vunpack.c.h.b16 %v236
    %v1254 = vunpack.c.l.b16 %v237
    %v1255 = vunpack.c.h.b16 %v237
    %v1256 = vunpack.c.l.b16 %v238
    %v1257 = vunpack.c.h.b16 %v238
    %v1258 = vunpack.c.l.b16 %v239
    %v1259 = vunpack.c.h.b16 %v239
    %v1260 = vunpack.c.l.b16 %v240
    %v1261 = vunpack.c.h.b16 %v240
    %v1262 = vunpack.c.l.b16 %v241
    %v1263 = vunpack.c.h.b16 %v241
    %v1264 = vunpack.c.l.b16 %v242
    %v1265 = vunpack.c.h.b16 %v242
    %v1266 = vunpack.c.l.b16 %v243
    %v1267 = vunpack.c.h.b16 %v243
    %v1268 = vunpack.c.l.b16 %v244
    %v1269 = vunpack.c.h.b16 %v244
    %v1270 = vunpack.c.l.b16 %v245
    %v1271 = vunpack.c.h.b16 %v245
    %v1272 = vunpack.c.l.b16 %v246
    %v1273 = vunpack.c.h.b16 %v246
    %v1274 = vunpack.c.l.b16 %v247
    %v1275 = vunpack.c.h.b16 %v247
    %v1276 = vunpack.c.l.b16 %v248
    %v1277 = vunpack.c.h.b16 %v248
    %v1278 = vunpack.c.l.b16 %v249
    %v1279 = vunpack.c.h.b16 %v249
    %v1280 = vunpack.c.l.b16 %v250
    %v1281 = vunpack.c.h.b16 %v250
    %v1282 = vunpack.c.l.b16 %v251
    %v1283 = vunpack.c.h.b16 %v251
    %v1284 = vunpack.c.l.b16 %v252
    %v1285 = vunpack.c.h.b16 %v252
    %v1286 = vunpack.c.l.b16 %v253
    %v1287 = vunpack.c.h.b16 %v253
    %v1288 = vunpack.c.l.b16 %v254
    %v1289 = vunpack.c.h.b16 %v254
    %v1290 = vunpack.c.l.b16 %v255
    %v1291 = vunpack.c.h.b16 %v255
    %v1292 = vunpack.c.l.b16 %v256
    %v1293 = vunpack.c.h.b16 %v256
    %v1294 = vunpack.c.l.b16 %v257
    %v1295 = vunpack.c.h.b16 %v257
    %v1296 = vunpack.c.l.b16 %v258
    %v1297 = vunpack.c.h.b16 %v258
    %v1298 = vunpack.c.l.b16 %v259
    %v1299 = vunpack.c.h.b16 %v259
    %v1300 = vunpack.c.l.b16 %v260
    %v1301 = vunpack.c.h.b16 %v260
    %v1302 = vunpack.c.l.b16 %v261
    %v1303 = vunpack.c.h.b16 %v261
    %v1304 = vunpack.c.l.b16 %v262
    %v1305 = vunpack.c.h.b16 %v262
    %v1306 = vunpack.c.l.b16 %v263
    %v1307 = vunpack.c.h.b16 %v263
    %v1308 = vunpack.c.l.b16 %v264
    %v1309 = vunpack.c.h.b16 %v264
    %v1310 = vunpack.c.l.b16 %v265
    %v1311 = vunpack.c.h.b16 %v265
    %v1312 = vunpack.c.l.b16 %v266
    %v1313 = vunpack.c.h.b16 %v266
    %v1314 = vunpack.c.l.b16 %v267
    %v1315 = vunpack.c.h.b16 %v267
    %v1316 = vunpack.c.l.b16 %v268
    %v1317 = vunpack.c.h.b16 %v268
    %v1318 = vunpack.c.l.b16 %v269
    %v1319 = vunpack.c.h.b16 %v269
    %v1320 = vunpack.c.l.b16 %v270
    %v1321 = vunpack.c.h.b16 %v270
    %v1322 = vunpack.c.l.b16 %v271
    %v1323 = vunpack.c.h.b16 %v271
    %v1324 = vunpack.c.l.b16 %v272
    %v1325 = vunpack.c.h.b16 %v272
    %v1326 = vunpack.c.l.b16 %v273
    %v1327 = vunpack.c.h.b16 %v273
    %v1328 = vunpack.c.l.b16 %v274
    %v1329 = vunpack.c.h.b16 %v274
    %v1330 = vunpack.c.l.b16 %v275
    %v1331 = vunpack.c.h.b16 %v275
    %v1332 = vunpack.c.l.b16 %v276
    %v1333 = vunpack.c.h.b16 %v276
    %v1334 = vunpack.c.l.b16 %v277
    %v1335 = vunpack.c.h.b16 %v277
    %v1336 = vunpack.c.l.b16 %v278
    %v1337 = vunpack.c.h.b16 %v278
    %v1338 = vunpack.c.l.b16 %v279
    %v1339 = vunpack.c.h.b16 %v279
    %v1340 = vunpack.c.l.b16 %v280
    %v1341 = vunpack.c.h.b16 %v280
    %v1342 = vunpack.c.l.b16 %v281
    %v1343 = vunpack.c.h.b16 %v281
    %v1344 = vunpack.c.l.b16 %v282
    %v1345 = vunpack.c.h.b16 %v282
    %v1346 = vunpack.c.l.b16 %v283
    %v1347 = vunpack.c.h.b16 %v283
    %v1348 = vunpack.c.l.b16 %v284
    %v1349 = vunpack.c.h.b16 %v284
    %v1350 = vunpack.c.l.b16 %v285
    %v1351 = vunpack.c.h.b16 %v285
    %v1352 = vunpack.c.l.b16 %v286
    %v1353 = vunpack.c.h.b16 %v286
    %v1354 = vunpack.c.l.b16 %v287
    %v1355 = vunpack.c.h.b16 %v287
    %v1356 = vunpack.c.l.b16 %v288
    %v1357 = vunpack.c.h.b16 %v288
    %v1358 = vunpack.c.l.b16 %v289
    %v1359 = vunpack.c.h.b16 %v289
    %v1360 = vunpack.c.l.b16 %v290
    %v1361 = vunpack.c.h.b16 %v290
    %v1362 = vunpack.c.l.b16 %v291
    %v1363 = vunpack.c.h.b16 %v291
    %v1364 = vunpack.c.l.b16 %v292
    %v1365 = vunpack.c.h.b16 %v292
    %v1366 = vunpack.c.l.b16 %v293
    %v1367 = vunpack.c.h.b16 %v293
    %v1368 = vunpack.c.l.b16 %v294
    %v1369 = vunpack.c.h.b16 %v294
    %v1370 = vunpack.c.l.b16 %v295
    %v1371 = vunpack.c.h.b16 %v295
    %v1372 = vunpack.c.l.b16 %v296
    %v1373 = vunpack.c.h.b16 %v296
    %v1374 = vunpack.c.l.b16 %v297
    %v1375 = vunpack.c.h.b16 %v297
    %v1376 = vunpack.c.l.b16 %v298
    %v1377 = vunpack.c.h.b16 %v298
    %v1378 = vunpack.c.l.b16 %v299
    %v1379 = vunpack.c.h.b16 %v299
    %v1380 = vunpack.c.l.b16 %v300
    %v1381 = vunpack.c.h.b16 %v300
    %v1382 = vunpack.c.l.b16 %v301
    %v1383 = vunpack.c.h.b16 %v301
    %v1384 = vunpack.c.l.b16 %v302
    %v1385 = vunpack.c.h.b16 %v302
    %v1386 = vunpack.c.l.b16 %v303
    %v1387 = vunpack.c.h.b16 %v303
    %v1388 = vunpack.c.l.b16 %v304
    %v1389 = vunpack.c.h.b16 %v304
    %v1390 = vunpack.c.l.b16 %v305
    %v1391 = vunpack.c.h.b16 %v305
    %v1392 = vunpack.c.l.b16 %v306
    %v1393 = vunpack.c.h.b16 %v306
    %v1394 = vunpack.c.l.b16 %v307
    %v1395 = vunpack.c.h.b16 %v307
    %v1396 = vunpack.c.l.b16 %v308
    %v1397 = vunpack.c.h.b16 %v308
    %v1398 = vunpack.c.l.b16 %v309
    %v1399 = vunpack.c.h.b16 %v309
    %v1400 = vunpack.c.l.b16 %v310
    %v1401 = vunpack.c.h.b16 %v310
    %v1402 = vunpack.c.l.b16 %v311
    %v1403 = vunpack.c.h.b16 %v311
    %v1404 = vunpack.c.l.b16 %v312
    %v1405 = vunpack.c.h.b16 %v312
    %v1406 = vunpack.c.l.b16 %v313
    %v1407 = vunpack.c.h.b16 %v313
    %v1408 = vunpack.c.l.b16 %v314
    %v1409 = vunpack.c.h.b16 %v314
    %v1410 = vunpack.c.l.b16 %v315
    %v1411 = vunpack.c.h.b16 %v315
    %v1412 = vunpack.c.l.b16 %v316
    %v1413 = vunpack.c.h.b16 %v316
    %v1414 = vunpack.c.l.b16 %v317
    %v1415 = vunpack.c.h.b16 %v317
    %v1416 = vunpack.c.l.b16 %v318
    %v1417 = vunpack.c.h.b16 %v318
    %v1418 = vunpack.c.l.b16 %v319
    %v1419 = vunpack.c.h.b16 %v319
    %v1420 = vunpack.c.l.b16 %v320
    %v1421 = vunpack.c.h.b16 %v320
    %v1422 = vunpack.c.l.b16 %v321
    %v1423 = vunpack.c.h.b16 %v321
    %v1424 = vunpack.c.l.b16 %v322
    %v1425 = vunpack.c.h.b16 %v322
    %v1426 = vunpack.c.l.b16 %v323
    %v1427 = vunpack.c.h.b16 %v323
    %v1428 = vunpack.c.l.b16 %v324
    %v1429 = vunpack.c.h.b16 %v324
    %v1430 = vunpack.c.l.b16 %v325
    %v1431 = vunpack.c.h.b16 %v325
    %v1432 = vunpack.c.l.b16 %v326
    %v1433 = vunpack.c.h.b16 %v326
    %v1434 = vunpack.c.l.b16 %v327
    %v1435 = vunpack.c.h.b16 %v327
    %v1436 = vunpack.c.l.b16 %v328
    %v1437 = vunpack.c.h.b16 %v328
    %v1438 = vunpack.c.l.b16 %v329
    %v1439 = vunpack.c.h.b16 %v329
    %v1440 = vunpack.c.l.b16 %v330
    %v1441 = vunpack.c.h.b16 %v330
    %v1442 = vunpack.c.l.b16 %v331
    %v1443 = vunpack.c.h.b16 %v331
    %v1444 = vunpack.c.l.b16 %v332
    %v1445 = vunpack.c.h.b16 %v332
    %v1446 = vunpack.c.l.b16 %v333
    %v1447 = vunpack.c.h.b16 %v333
    %v1448 = vunpack.c.l.b16 %v334
    %v1449 = vunpack.c.h.b16 %v334
    %v1450 = vunpack.c.l.b16 %v335
    %v1451 = vunpack.c.h.b16 %v335
    %v1452 = vunpack.c.l.b16 %v336
    %v1453 = vunpack.c.h.b16 %v336
    %v1454 = vunpack.c.l.b16 %v337
    %v1455 = vunpack.c.h.b16 %v337
    %v1456 = vunpack.c.l.b16 %v338
    %v1457 = vunpack.c.h.b16 %v338
    %v1458 = vunpack.c.l.b16 %v339
    %v1459 = vunpack.c.h.b16 %v339
    %v1460 = vunpack.c.l.b16 %v340
    %v1461 = vunpack.c.h.b16 %v340
    %v1462 = vunpack.c.l.b16 %v341
    %v1463 = vunpack.c.h.b16 %v341
    %v1464 = vunpack.c.l.b16 %v342
    %v1465 = vunpack.c.h.b16 %v342
    %v1466 = vunpack.c.l.b16 %v343
    %v1467 = vunpack.c.h.b16 %v343
    %v1468 = vunpack.c.l.b16 %v344
    %v1469 = vunpack.c.h.b16 %v344
    %v1470 = vunpack.c.l.b16 %v345
    %v1471 = vunpack.c.h.b16 %v345
    %v1472 = vunpack.c.l.b16 %v346
    %v1473 = vunpack.c.h.b16 %v346
    %v1474 = vunpack.c.l.b16 %v347
    %v1475 = vunpack.c.h.b16 %v347
    %v1476 = vunpack.c.l.b16 %v348
    %v1477 = vunpack.c.h.b16 %v348
    %v1478 = vunpack.c.l.b16 %v349
    %v1479 = vunpack.c.h.b16 %v349
    %v1480 = vunpack.c.l.b16 %v350
    %v1481 = vunpack.c.h.b16 %v350
    %v1482 = vunpack.c.l.b16 %v351
    %v1483 = vunpack.c.h.b16 %v351
    %v1484 = vunpack.c.l.b16 %v352
    %v1485 = vunpack.c.h.b16 %v352
    %v1486 = vunpack.c.l.b16 %v353
    %v1487 = vunpack.c.h.b16 %v353
    %v1488 = vunpack.c.l.b16 %v354
    %v1489 = vunpack.c.h.b16 %v354
    %v1490 = vunpack.c.l.b16 %v355
    %v1491 = vunpack.c.h.b16 %v355
    %v1492 = vunpack.c.l.b16 %v356
    %v1493 = vunpack.c.h.b16 %v356
    %v1494 = vunpack.c.l.b16 %v357
    %v1495 = vunpack.c.h.b16 %v357
    %v1496 = vunpack.c.l.b16 %v358
    %v1497 = vunpack.c.h.b16 %v358
    %v1498 = vunpack.c.l.b16 %v359
    %v1499 = vunpack.c.h.b16 %v359
    %v1500 = vunpack.c.l.b16 %v360
    %v1501 = vunpack.c.h.b16 %v360
    %v1502 = vunpack.c.l.b16 %v361
    %v1503 = vunpack.c.h.b16 %v361
    %v1504 = vunpack.c.l.b16 %v362
    %v1505 = vunpack.c.h.b16 %v362
    %v1506 = vunpack.c.l.b16 %v363
    %v1507 = vunpack.c.h.b16 %v363
    %v1508 = vunpack.c.l.b16 %v364
    %v1509 = vunpack.c.h.b16 %v364
    %v1510 = vunpack.c.l.b16 %v365
    %v1511 = vunpack.c.h.b16 %v365
    %v1512 = vunpack.c.l.b16 %v366
    %v1513 = vunpack.c.h.b16 %v366
    %v1514 = vunpack.c.l.b16 %v367
    %v1515 = vunpack.c.h.b16 %v367
    %v1516 = vunpack.c.l.b16 %v368
    %v1517 = vunpack.c.h.b16 %v368
    %v1518 = vunpack.c.l.b16 %v369
    %v1519 = vunpack.c.h.b16 %v369
    %v1520 = vunpack.c.l.b16 %v370
    %v1521 = vunpack.c.h.b16 %v370
    %v1522 = vunpack.c.l.b16 %v371
    %v1523 = vunpack.c.h.b16 %v371
    %v1524 = vunpack.c.l.b16 %v372
    %v1525 = vunpack.c.h.b16 %v372
    %v1526 = vunpack.c.l.b16 %v373
    %v1527 = vunpack.c.h.b16 %v373
    %v1528 = vunpack.c.l.b16 %v374
    %v1529 = vunpack.c.h.b16 %v374
    %v1530 = vunpack.c.l.b16 %v375
    %v1531 = vunpack.c.h.b16 %v375
    %v1532 = vunpack.c.l.b16 %v376
    %v1533 = vunpack.c.h.b16 %v376
    %v1534 = vunpack.c.l.b16 %v377
    %v1535 = vunpack.c.h.b16 %v377
    %v1536 = vunpack.c.l.b16 %v378
    %v1537 = vunpack.c.h.b16 %v378
    %v1538 = vunpack.c.l.b16 %v379
    %v1539 = vunpack.c.h.b16 %v379
    %v1540 = vunpack.c.l.b16 %v380
    %v1541 = vunpack.c.h.b16 %v380
    %v1542 = vunpack.c.l.b16 %v381
    %v1543 = vunpack.c.h.b16 %v381
    %v1544 = vunpack.c.l.b16 %v382
    %v1545 = vunpack.c.h.b16 %v382
    %v1546 = vunpack.c.l.b16 %v383
    %v1547 = vunpack.c.h.b16 %v383
    %v1548 = vunpack.c.l.b16 %v384
    %v1549 = vunpack.c.h.b16 %v384
    %v1550 = vunpack.c.l.b16 %v385
    %v1551 = vunpack.c.h.b16 %v385
    %v1552 = vunpack.c.l.b16 %v386
    %v1553 = vunpack.c.h.b16 %v386
    %v1554 = vunpack.c.l.b16 %v387
    %v1555 = vunpack.c.h.b16 %v387
    %v1556 = vunpack.c.l.b16 %v388
    %v1557 = vunpack.c.h.b16 %v388
    %v1558 = vunpack.c.l.b16 %v389
    %v1559 = vunpack.c.h.b16 %v389
    %v1560 = vunpack.c.l.b16 %v390
    %v1561 = vunpack.c.h.b16 %v390
    %v1562 = vunpack.c.l.b16 %v391
    %v1563 = vunpack.c.h.b16 %v391
    %v1564 = vunpack.c.l.b16 %v392
    %v1565 = vunpack.c.h.b16 %v392
    %v1566 = vunpack.c.l.b16 %v393
    %v1567 = vunpack.c.h.b16 %v393
    %v1568 = vunpack.c.l.b16 %v394
    %v1569 = vunpack.c.h.b16 %v394
    %v1570 = vunpack.c.l.b16 %v395
    %v1571 = vunpack.c.h.b16 %v395
    %v1572 = vunpack.c.l.b16 %v396
    %v1573 = vunpack.c.h.b16 %v396
    %v1574 = vunpack.c.l.b16 %v397
    %v1575 = vunpack.c.h.b16 %v397
    %v1576 = vunpack.c.l.b16 %v398
    %v1577 = vunpack.c.h.b16 %v398
    %v1578 = vunpack.c.l.b16 %v399
    %v1579 = vunpack.c.h.b16 %v399
    %v1580 = vunpack.c.l.b16 %v400
    %v1581 = vunpack.c.h.b16 %v400
    %v1582 = vunpack.c.l.b16 %v401
    %v1583 = vunpack.c.h.b16 %v401
    %v1584 = vunpack.c.l.b16 %v402
    %v1585 = vunpack.c.h.b16 %v402
    %v1586 = vunpack.c.l.b16 %v403
    %v1587 = vunpack.c.h.b16 %v403
    %v1588 = vunpack.c.l.b16 %v404
    %v1589 = vunpack.c.h.b16 %v404
    %v1590 = vunpack.c.l.b16 %v405
    %v1591 = vunpack.c.h.b16 %v405
    %v1592 = vunpack.c.l.b16 %v406
    %v1593 = vunpack.c.h.b16 %v406
    %v1594 = vunpack.c.l.b16 %v407
    %v1595 = vunpack.c.h.b16 %v407
    %v1596 = vunpack.c.l.b16 %v408
    %v1597 = vunpack.c.h.b16 %v408
    %v1598 = vunpack.c.l.b16 %v409
    %v1599 = vunpack.c.h.b16 %v409
    %v1600 = vunpack.c.l.b16 %v410
    %v1601 = vunpack.c.h.b16 %v410
    %v1602 = vunpack.c.l.b16 %v411
    %v1603 = vunpack.c.h.b16 %v411
    %v1604 = vunpack.c.l.b16 %v412
    %v1605 = vunpack.c.h.b16 %v412
    %v1606 = vunpack.c.l.b16 %v413
    %v1607 = vunpack.c.h.b16 %v413
    %v1608 = vunpack.c.l.b16 %v414
    %v1609 = vunpack.c.h.b16 %v414
    %v1610 = vunpack.c.l.b16 %v415
    %v1611 = vunpack.c.h.b16 %v415
    %v1612 = vunpack.c.l.b16 %v416
    %v1613 = vunpack.c.h.b16 %v416
    %v1614 = vunpack.c.l.b16 %v417
    %v1615 = vunpack.c.h.b16 %v417
    %v1616 = vunpack.c.l.b16 %v418
    %v1617 = vunpack.c.h.b16 %v418
    %v1618 = vunpack.c.l.b16 %v419
    %v1619 = vunpack.c.h.b16 %v419
    %v1620 = vunpack.c.l.b16 %v420
    %v1621 = vunpack.c.h.b16 %v420
    %v1622 = vunpack.c.l.b16 %v421
    %v1623 = vunpack.c.h.b16 %v421
    %v1624 = vunpack.c.l.b16 %v422
    %v1625 = vunpack.c.h.b16 %v422
    %v1626 = vunpack.c.l.b16 %v423
    %v1627 = vunpack.c.h.b16 %v423
    %v1628 = vunpack.c.l.b16 %v424
    %v1629 = vunpack.c.h.b16 %v424
    %v1630 = vunpack.c.l.b16 %v425
    %v1631 = vunpack.c.h.b16 %v425
    %v1632 = vunpack.c.l.b16 %v426
    %v1633 = vunpack.c.h.b16 %v426
    %v1634 = vunpack.c.l.b16 %v427
    %v1635 = vunpack.c.h.b16 %v427
    %v1636 = vunpack.c.l.b16 %v428
    %v1637 = vunpack.c.h.b16 %v428
    %v1638 = vunpack.c.l.b16 %v429
    %v1639 = vunpack.c.h.b16 %v429
    %v1640 = vunpack.c.l.b16 %v430
    %v1641 = vunpack.c.h.b16 %v430
    %v1642 = vunpack.c.l.b16 %v431
    %v1643 = vunpack.c.h.b16 %v431
    %v1644 = vunpack.c.l.b16 %v432
    %v1645 = vunpack.c.h.b16 %v432
    %v1646 = vunpack.c.l.b16 %v433
    %v1647 = vunpack.c.h.b16 %v433
    %v1648 = vunpack.c.l.b16 %v434
    %v1649 = vunpack.c.h.b16 %v434
    %v1650 = vunpack.c.l.b16 %v435
    %v1651 = vunpack.c.h.b16 %v435
    %v1652 = vunpack.c.l.b16 %v436
    %v1653 = vunpack.c.h.b16 %v436
    %v1654 = vunpack.c.l.b16 %v437
    %v1655 = vunpack.c.h.b16 %v437
    %v1656 = vunpack.c.l.b16 %v438
    %v1657 = vunpack.c.h.b16 %v438
    %v1658 = vunpack.c.l.b16 %v439
    %v1659 = vunpack.c.h.b16 %v439
    %v1660 = vunpack.c.l.b16 %v440
    %v1661 = vunpack.c.h.b16 %v440
    %v1662 = vunpack.c.l.b16 %v441
    %v1663 = vunpack.c.h.b16 %v441
    %v1664 = vunpack.c.l.b16 %v442
    %v1665 = vunpack.c.h.b16 %v442
    %v1666 = vunpack.c.l.b16 %v443
    %v1667 = vunpack.c.h.b16 %v443
    %v1668 = vunpack.c.l.b16 %v444
    %v1669 = vunpack.c.h.b16 %v444
    %v1670 = vunpack.c.l.b16 %v445
    %v1671 = vunpack.c.h.b16 %v445
    %v1672 = vunpack.c.l.b16 %v446
    %v1673 = vunpack.c.h.b16 %v446
    %v1674 = vunpack.c.l.b16 %v447
    %v1675 = vunpack.c.h.b16 %v447
    %v1676 = vunpack.c.l.b16 %v448
    %v1677 = vunpack.c.h.b16 %v448
    %v1678 = vunpack.c.l.b16 %v449
    %v1679 = vunpack.c.h.b16 %v449
    %v1680 = vunpack.c.l.b16 %v450
    %v1681 = vunpack.c.h.b16 %v450
    %v1682 = vunpack.c.l.b16 %v451
    %v1683 = vunpack.c.h.b16 %v451
    %v1684 = vunpack.c.l.b16 %v452
    %v1685 = vunpack.c.h.b16 %v452
    %v1686 = vunpack.c.l.b16 %v453
    %v1687 = vunpack.c.h.b16 %v453
    %v1688 = vunpack.c.l.b16 %v454
    %v1689 = vunpack.c.h.b16 %v454
    %v1690 = vunpack.c.l.b16 %v455
    %v1691 = vunpack.c.h.b16 %v455
    %v1692 = vpack.c.b16 %v926, %v924
    %v1693 = vpack.c.b16 %v927, %v925
    %v1694 = vpack.c.b16 %v930, %v928
    %v1695 = vpack.c.b16 %v931, %v929
    %v1696 = vpack.c.b16 %v934, %v932
    %v1697 = vpack.c.b16 %v935, %v933
    %v1698 = vpack.c.b16 %v938, %v936
    %v1699 = vpack.c.b16 %v939, %v937
    %v1700 = vpack.c.b16 %v942, %v940
    %v1701 = vpack.c.b16 %v943, %v941
    %v1702 = vpack.c.b16 %v946, %v944
    %v1703 = vpack.c.b16 %v947, %v945
    %v1704 = vpack.c.b16 %v950, %v948
    %v1705 = vpack.c.b16 %v951, %v949
    %v1706 = vpack.c.b16 %v954, %v952
    %v1707 = vpack.c.b16 %v955, %v953
    %v1708 = vpack.c.b16 %v958, %v956
    %v1709 = vpack.c.b16 %v959, %v957
    %v1710 = vpack.c.b16 %v962, %v960
    %v1711 = vpack.c.b16 %v963, %v961
    %v1712 = vpack.c.b16 %v966, %v964
    %v1713 = vpack.c.b16 %v967, %v965
    %v1714 = vpack.c.b16 %v970, %v968
    %v1715 = vpack.c.b16 %v971, %v969
    %v1716 = vpack.c.b16 %v974, %v972
    %v1717 = vpack.c.b16 %v975, %v973
    %v1718 = vpack.c.b16 %v978, %v976
    %v1719 = vpack.c.b16 %v979, %v977
    %v1720 = vpack.c.b16 %v982, %v980
    %v1721 = vpack.c.b16 %v983, %v981
    %v1722 = vpack.c.b16 %v986, %v984
    %v1723 = vpack.c.b16 %v987, %v985
    %v1724 = vpack.c.b16 %v990, %v988
    %v1725 = vpack.c.b16 %v991, %v989
    %v1726 = vpack.c.b16 %v994, %v992
    %v1727 = vpack.c.b16 %v995, %v993
    %v1728 = vpack.c.b16 %v998, %v996
    %v1729 = vpack.c.b16 %v999, %v997
    %v1730 = vpack.c.b16 %v1002, %v1000
    %v1731 = vpack.c.b16 %v1003, %v1001
    %v1732 = vpack.c.b16 %v1006, %v1004
    %v1733 = vpack.c.b16 %v1007, %v1005
    %v1734 = vpack.c.b16 %v1010, %v1008
    %v1735 = vpack.c.b16 %v1011, %v1009
    %v1736 = vpack.c.b16 %v1014, %v1012
    %v1737 = vpack.c.b16 %v1015, %v1013
    %v1738 = vpack.c.b16 %v1018, %v1016
    %v1739 = vpack.c.b16 %v1019, %v1017
    %v1740 = vpack.c.b16 %v1022, %v1020
    %v1741 = vpack.c.b16 %v1023, %v1021
    %v1742 = vpack.c.b16 %v1026, %v1024
    %v1743 = vpack.c.b16 %v1027, %v1025
    %v1744 = vpack.c.b16 %v1030, %v1028
    %v1745 = vpack.c.b16 %v1031, %v1029
    %v1746 = vpack.c.b16 %v1034, %v1032
    %v1747 = vpack.c.b16 %v1035, %v1033
    %v1748 = vpack.c.b16 %v1038, %v1036
    %v1749 = vpack.c.b16 %v1039, %v1037
    %v1750 = vpack.c.b16 %v1042, %v1040
    %v1751 = vpack.c.b16 %v1043, %v1041
    %v1752 = vpack.c.b16 %v1046, %v1044
    %v1753 = vpack.c.b16 %v1047, %v1045
    %v1754 = vpack.c.b16 %v1050, %v1048
    %v1755 = vpack.c.b16 %v1051, %v1049
    %v1756 = vpack.c.b16 %v1054, %v1052
    %v1757 = vpack.c.b16 %v1055, %v1053
    %v1758 = vpack.c.b16 %v1058, %v1056
    %v1759 = vpack.c.b16 %v1059, %v1057
    %v1760 = vpack.c.b16 %v1062, %v1060
    %v1761 = vpack.c.b16 %v1063, %v1061
    %v1762 = vpack.c.b16 %v1066, %v1064
    %v1763 = vpack.c.b16 %v1067, %v1065
    %v1764 = vpack.c.b16 %v1070, %v1068
    %v1765 = vpack.c.b16 %v1071, %v1069
    %v1766 = vpack.c.b16 %v1074, %v1072
    %v1767 = vpack.c.b16 %v1075, %v1073
    %v1768 = vpack.c.b16 %v1078, %v1076
    %v1769 = vpack.c.b16 %v1079, %v1077
    %v1770 = vpack.c.b16 %v1082, %v1080
    %v1771 = vpack.c.b16 %v1083, %v1081
    %v1772 = vpack.c.b16 %v1086, %v1084
    %v1773 = vpack.c.b16 %v1087, %v1085
    %v1774 = vpack.c.b16 %v1090, %v1088
    %v1775 = vpack.c.b16 %v1091, %v1089
    %v1776 = vpack.c.b16 %v1094, %v1092
    %v1777 = vpack.c.b16 %v1095, %v1093
    %v1778 = vpack.c.b16 %v1098, %v1096
    %v1779 = vpack.c.b16 %v1099, %v1097
    %v1780 = vpack.c.b16 %v1102, %v1100
    %v1781 = vpack.c.b16 %v1103, %v1101
    %v1782 = vpack.c.b16 %v1106, %v1104
    %v1783 = vpack.c.b16 %v1107, %v1105
    %v1784 = vpack.c.b16 %v1110, %v1108
    %v1785 = vpack.c.b16 %v1111, %v1109
    %v1786 = vpack.c.b16 %v1114, %v1112
    %v1787 = vpack.c.b16 %v1115, %v1113
    %v1788 = vpack.c.b16 %v1118, %v1116
    %v1789 = vpack.c.b16 %v1119, %v1117
    %v1790 = vpack.c.b16 %v1122, %v1120
    %v1791 = vpack.c.b16 %v1123, %v1121
    %v1792 = vpack.c.b16 %v1126, %v1124
    %v1793 = vpack.c.b16 %v1127, %v1125
    %v1794 = vpack.c.b16 %v1130, %v1128
    %v1795 = vpack.c.b16 %v1131, %v1129
    %v1796 = vpack.c.b16 %v1134, %v1132
    %v1797 = vpack.c.b16 %v1135, %v1133
    %v1798 = vpack.c.b16 %v1138, %v1136
    %v1799 = vpack.c.b16 %v1139, %v1137
    %v1800 = vpack.c.b16 %v1142, %v1140
    %v1801 = vpack.c.b16 %v1143, %v1141
    %v1802 = vpack.c.b16 %v1146, %v1144
    %v1803 = vpack.c.b16 %v1147, %v1145
    %v1804 = vpack.c.b16 %v1150, %v1148
    %v1805 = vpack.c.b16 %v1151, %v1149
    %v1806 = vpack.c.b16 %v1154, %v1152
    %v1807 = vpack.c.b16 %v1155, %v1153
    %v1808 = vpack.c.b16 %v1158, %v1156
    %v1809 = vpack.c.b16 %v1159, %v1157
    %v1810 = vpack.c.b16 %v1162, %v1160
    %v1811 = vpack.c.b16 %v1163, %v1161
    %v1812 = vpack.c.b16 %v1166, %v1164
    %v1813 = vpack.c.b16 %v1167, %v1165
    %v1814 = vpack.c.b16 %v1170, %v1168
    %v1815 = vpack.c.b16 %v1171, %v1169
    %v1816 = vpack.c.b16 %v1174, %v1172
    %v1817 = vpack.c.b16 %v1175, %v1173
    %v1818 = vpack.c.b16 %v1178, %v1176
    %v1819 = vpack.c.b16 %v1179, %v1177
    %v1820 = vpack.c.b16 %v1182, %v1180
    %v1821 = vpack.c.b16 %v1183, %v1181
    %v1822 = vpack.c.b16 %v1186, %v1184
    %v1823 = vpack.c.b16 %v1187, %v1185
    %v1824 = vpack.c.b16 %v1190, %v1188
    %v1825 = vpack.c.b16 %v1191, %v1189
    %v1826 = vpack.c.b16 %v1194, %v1192
    %v1827 = vpack.c.b16 %v1195, %v1193
    %v1828 = vpack.c.b16 %v1198, %v1196
    %v1829 = vpack.c.b16 %v1199, %v1197
    %v1830 = vpack.c.b16 %v1202, %v1200
    %v1831 = vpack.c.b16 %v1203, %v1201
    %v1832 = vpack.c.b16 %v1206, %v1204
    %v1833 = vpack.c.b16 %v1207, %v1205
    %v1834 = vpack.c.b16 %v1210, %v1208
    %v1835 = vpack.c.b16 %v1211, %v1209
    %v1836 = vpack.c.b16 %v1214, %v1212
    %v1837 = vpack.c.b16 %v1215, %v1213
    %v1838 = vpack.c.b16 %v1218, %v1216
    %v1839 = vpack.c.b16 %v1219, %v1217
    %v1840 = vpack.c.b16 %v1222, %v1220
    %v1841 = vpack.c.b16 %v1223, %v1221
    %v1842 = vpack.c.b16 %v1226, %v1224
    %v1843 = vpack.c.b16 %v1227, %v1225
    %v1844 = vpack.c.b16 %v1230, %v1228
    %v1845 = vpack.c.b16 %v1231, %v1229
    %v1846 = vpack.c.b16 %v1234, %v1232
    %v1847 = vpack.c.b16 %v1235, %v1233
    %v1848 = vpack.c.b16 %v1238, %v1236
    %v1849 = vpack.c.b16 %v1239, %v1237
    %v1850 = vpack.c.b16 %v1242, %v1240
    %v1851 = vpack.c.b16 %v1243, %v1241
    %v1852 = vpack.c.b16 %v1246, %v1244
    %v1853 = vpack.c.b16 %v1247, %v1245
    %v1854 = vpack.c.b16 %v1250, %v1248
    %v1855 = vpack.c.b16 %v1251, %v1249
    %v1856 = vpack.c.b16 %v1254, %v1252
    %v1857 = vpack.c.b16 %v1255, %v1253
    %v1858 = vpack.c.b16 %v1258, %v1256
    %v1859 = vpack.c.b16 %v1259, %v1257
    %v1860 = vpack.c.b16 %v1262, %v1260
    %v1861 = vpack.c.b16 %v1263, %v1261
    %v1862 = vpack.c.b16 %v1266, %v1264
    %v1863 = vpack.c.b16 %v1267, %v1265
    %v1864 = vpack.c.b16 %v1270, %v1268
    %v1865 = vpack.c.b16 %v1271, %v1269
    %v1866 = vpack.c.b16 %v1274, %v1272
    %v1867 = vpack.c.b16 %v1275, %v1273
    %v1868 = vpack.c.b16 %v1278, %v1276
    %v1869 = vpack.c.b16 %v1279, %v1277
    %v1870 = vpack.c.b16 %v1282, %v1280
    %v1871 = vpack.c.b16 %v1283, %v1281
    %v1872 = vpack.c.b16 %v1286, %v1284
    %v1873 = vpack.c.b16 %v1287, %v1285
    %v1874 = vpack.c.b16 %v1290, %v1288
    %v1875 = vpack.c.b16 %v1291, %v1289
    %v1876 = vpack.c.b16 %v1294, %v1292
    %v1877 = vpack.c.b16 %v1295, %v1293
    %v1878 = vpack.c.b16 %v1298, %v1296
    %v1879 = vpack.c.b16 %v1299, %v1297
    %v1880 = vpack.c.b16 %v1302, %v1300
    %v1881 = vpack.c.b16 %v1303, %v1301
    %v1882 = vpack.c.b16 %v1306, %v1304
    %v1883 = vpack.c.b16 %v1307, %v1305
    %v1884 = vpack.c.b16 %v1310, %v1308
    %v1885 = vpack.c.b16 %v1311, %v1309
    %v1886 = vpack.c.b16 %v1314, %v1312
    %v1887 = vpack.c.b16 %v1315, %v1313
    %v1888 = vpack.c.b16 %v1318, %v1316
    %v1889 = vpack.c.b16 %v1319, %v1317
    %v1890 = vpack.c.b16 %v1322, %v1320
    %v1891 = vpack.c.b16 %v1323, %v1321
    %v1892 = vpack.c.b16 %v1326, %v1324
    %v1893 = vpack.c.b16 %v1327, %v1325
    %v1894 = vpack.c.b16 %v1330, %v1328
    %v1895 = vpack.c.b16 %v1331, %v1329
    %v1896 = vpack.c.b16 %v1334, %v1332
    %v1897 = vpack.c.b16 %v1335, %v1333
    %v1898 = vpack.c.b16 %v1338, %v1336
    %v1899 = vpack.c.b16 %v1339, %v1337
    %v1900 = vpack.c.b16 %v1342, %v1340
    %v1901 = vpack.c.b16 %v1343, %v1341
    %v1902 = vpack.c.b16 %v1346, %v1344
    %v1903 = vpack.c.b16 %v1347, %v1345
    %v1904 = vpack.c.b16 %v1350, %v1348
    %v1905 = vpack.c.b16 %v1351, %v1349
    %v1906 = vpack.c.b16 %v1354, %v1352
    %v1907 = vpack.c.b16 %v1355, %v1353
    %v1908 = vpack.c.b16 %v1358, %v1356
    %v1909 = vpack.c.b16 %v1359, %v1357
    %v1910 = vpack.c.b16 %v1362, %v1360
    %v1911 = vpack.c.b16 %v1363, %v1361
    %v1912 = vpack.c.b16 %v1366, %v1364
    %v1913 = vpack.c.b16 %v1367, %v1365
    %v1914 = vpack.c.b16 %v1370, %v1368
    %v1915 = vpack.c.b16 %v1371, %v1369
    %v1916 = vpack.c.b16 %v1374, %v1372
    %v1917 = vpack.c.b16 %v1375, %v1373
    %v1918 = vpack.c.b16 %v1378, %v1376
    %v1919 = vpack.c.b16 %v1379, %v1377
    %v1920 = vpack.c.b16 %v1382, %v1380
    %v1921 = vpack.c.b16 %v1383, %v1381
    %v1922 = vpack.c.b16 %v1386, %v1384
    %v1923 = vpack.c.b16 %v1387, %v1385
    %v1924 = vpack.c.b16 %v1390, %v1388
    %v1925 = vpack.c.b16 %v1391, %v1389
    %v1926 = vpack.c.b16 %v1394, %v1392
    %v1927 = vpack.c.b16 %v1395, %v1393
    %v1928 = vpack.c.b16 %v1398, %v1396
    %v1929 = vpack.c.b16 %v1399, %v1397
    %v1930 = vpack.c.b16 %v1402, %v1400
    %v1931 = vpack.c.b16 %v1403, %v1401
    %v1932 = vpack.c.b16 %v1406, %v1404
    %v1933 = vpack.c.b16 %v1407, %v1405
    %v1934 = vpack.c.b16 %v1410, %v1408
    %v1935 = vpack.c.b16 %v1411, %v1409
    %v1936 = vpack.c.b16 %v1414, %v1412
    %v1937 = vpack.c.b16 %v1415, %v1413
    %v1938 = vpack.c.b16 %v1418, %v1416
    %v1939 = vpack.c.b16 %v1419, %v1417
    %v1940 = vpack.c.b16 %v1422, %v1420
    %v1941 = vpack.c.b16 %v1423, %v1421
    %v1942 = vpack.c.b16 %v1426, %v1424
    %v1943 = vpack.c.b16 %v1427, %v1425
    %v1944 = vpack.c.b16 %v1430, %v1428
    %v1945 = vpack.c.b16 %v1431, %v1429
    %v1946 = vpack.c.b16 %v1434, %v1432
    %v1947 = vpack.c.b16 %v1435, %v1433
    %v1948 = vpack.c.b16 %v1438, %v1436
    %v1949 = vpack.c.b16 %v1439, %v1437
    %v1950 = vpack.c.b16 %v1442, %v1440
    %v1951 = vpack.c.b16 %v1443, %v1441
    %v1952 = vpack.c.b16 %v1446, %v1444
    %v1953 = vpack.c.b16 %v1447, %v1445
    %v1954 = vpack.c.b16 %v1450, %v1448
    %v1955 = vpack.c.b16 %v1451, %v1449
    %v1956 = vpack.c.b16 %v1454, %v1452
    %v1957 = vpack.c.b16 %v1455, %v1453
    %v1958 = vpack.c.b16 %v1458, %v1456
    %v1959 = vpack.c.b16 %v1459, %v1457
    %v1960 = vpack.c.b16 %v1462, %v1460
    %v1961 = vpack.c.b16 %v1463, %v1461
    %v1962 = vpack.c.b16 %v1466, %v1464
    %v1963 = vpack.c.b16 %v1467, %v1465
    %v1964 = vpack.c.b16 %v1470, %v1468
    %v1965 = vpack.c.b16 %v1471, %v1469
    %v1966 = vpack.c.b16 %v1474, %v1472
    %v1967 = vpack.c.b16 %v1475, %v1473
    %v1968 = vpack.c.b16 %v1478, %v1476
    %v1969 = vpack.c.b16 %v1479, %v1477
    %v1970 = vpack.c.b16 %v1482, %v1480
    %v1971 = vpack.c.b16 %v1483, %v1481
    %v1972 = vpack.c.b16 %v1486, %v1484
    %v1973 = vpack.c.b16 %v1487, %v1485
    %v1974 = vpack.c.b16 %v1490, %v1488
    %v1975 = vpack.c.b16 %v1491, %v1489
    %v1976 = vpack.c.b16 %v1494, %v1492
    %v1977 = vpack.c.b16 %v1495, %v1493
    %v1978 = vpack.c.b16 %v1498, %v1496
    %v1979 = vpack.c.b16 %v1499, %v1497
    %v1980 = vpack.c.b16 %v1502, %v1500
    %v1981 = vpack.c.b16 %v1503, %v1501
    %v1982 = vpack.c.b16 %v1506, %v1504
    %v1983 = vpack.c.b16 %v1507, %v1505
    %v1984 = vpack.c.b16 %v1510, %v1508
    %v1985 = vpack.c.b16 %v1511, %v1509
    %v1986 = vpack.c.b16 %v1514, %v1512
    %v1987 = vpack.c.b16 %v1515, %v1513
    %v1988 = vpack.c.b16 %v1518, %v1516
    %v1989 = vpack.c.b16 %v1519, %v1517
    %v1990 = vpack.c.b16 %v1522, %v1520
    %v1991 = vpack.c.b16 %v1523, %v1521
    %v1992 = vpack.c.b16 %v1526, %v1524
    %v1993 = vpack.c.b16 %v1527, %v1525
    %v1994 = vpack.c.b16 %v1530, %v1528
    %v1995 = vpack.c.b16 %v1531, %v1529
    %v1996 = vpack.c.b16 %v1534, %v1532
    %v1997 = vpack.c.b16 %v1535, %v1533
    %v1998 = vpack.c.b16 %v1538, %v1536
    %v1999 = vpack.c.b16 %v1539, %v1537
    %v2000 = vpack.c.b16 %v1542, %v1540
    %v2001 = vpack.c.b16 %v1543, %v1541
    %v2002 = vpack.c.b16 %v1546, %v1544
    %v2003 = vpack.c.b16 %v1547, %v1545
    %v2004 = vpack.c.b16 %v1550, %v1548
    %v2005 = vpack.c.b16 %v1551, %v1549
    %v2006 = vpack.c.b16 %v1554, %v1552
    %v2007 = vpack.c.b16 %v1555, %v1553
    %v2008 = vpack.c.b16 %v1558, %v1556
    %v2009 = vpack.c.b16 %v1559, %v1557
    %v2010 = vpack.c.b16 %v1562, %v1560
    %v2011 = vpack.c.b16 %v1563, %v1561
    %v2012 = vpack.c.b16 %v1566, %v1564
    %v2013 = vpack.c.b16 %v1567, %v1565
    %v2014 = vpack.c.b16 %v1570, %v1568
    %v2015 = vpack.c.b16 %v1571, %v1569
    %v2016 = vpack.c.b16 %v1574, %v1572
    %v2017 = vpack.c.b16 %v1575, %v1573
    %v2018 = vpack.c.b16 %v1578, %v1576
    %v2019 = vpack.c.b16 %v1579, %v1577
    %v2020 = vpack.c.b16 %v1582, %v1580
    %v2021 = vpack.c.b16 %v1583, %v1581
    %v2022 = vpack.c.b16 %v1586, %v1584
    %v2023 = vpack.c.b16 %v1587, %v1585
    %v2024 = vpack.c.b16 %v1590, %v1588
    %v2025 = vpack.c.b16 %v1591, %v1589
    %v2026 = vpack.c.b16 %v1594, %v1592
    %v2027 = vpack.c.b16 %v1595, %v1593
    %v2028 = vpack.c.b16 %v1598, %v1596
    %v2029 = vpack.c.b16 %v1599, %v1597
    %v2030 = vpack.c.b16 %v1602, %v1600
    %v2031 = vpack.c.b16 %v1603, %v1601
    %v2032 = vpack.c.b16 %v1606, %v1604
    %v2033 = vpack.c.b16 %v1607, %v1605
    %v2034 = vpack.c.b16 %v1610, %v1608
    %v2035 = vpack.c.b16 %v1611, %v1609
    %v2036 = vpack.c.b16 %v1614, %v1612
    %v2037 = vpack.c.b16 %v1615, %v1613
    %v2038 = vpack.c.b16 %v1618, %v1616
    %v2039 = vpack.c.b16 %v1619, %v1617
    %v2040 = vpack.c.b16 %v1622, %v1620
    %v2041 = vpack.c.b16 %v1623, %v1621
    %v2042 = vpack.c.b16 %v1626, %v1624
    %v2043 = vpack.c.b16 %v1627, %v1625
    %v2044 = vpack.c.b16 %v1630, %v1628
    %v2045 = vpack.c.b16 %v1631, %v1629
    %v2046 = vpack.c.b16 %v1634, %v1632
    %v2047 = vpack.c.b16 %v1635, %v1633
    %v2048 = vpack.c.b16 %v1638, %v1636
    %v2049 = vpack.c.b16 %v1639, %v1637
    %v2050 = vpack.c.b16 %v1642, %v1640
    %v2051 = vpack.c.b16 %v1643, %v1641
    %v2052 = vpack.c.b16 %v1646, %v1644
    %v2053 = vpack.c.b16 %v1647, %v1645
    %v2054 = vpack.c.b16 %v1650, %v1648
    %v2055 = vpack.c.b16 %v1651, %v1649
    %v2056 = vpack.c.b16 %v1654, %v1652
    %v2057 = vpack.c.b16 %v1655, %v1653
    %v2058 = vpack.c.b16 %v1658, %v1656
    %v2059 = vpack.c.b16 %v1659, %v1657
    %v2060 = vpack.c.b16 %v1662, %v1660
    %v2061 = vpack.c.b16 %v1663, %v1661
    %v2062 = vpack.c.b16 %v1666, %v1664
    %v2063 = vpack.c.b16 %v1667, %v1665
    %v2064 = vpack.c.b16 %v1670, %v1668
    %v2065 = vpack.c.b16 %v1671, %v1669
    %v2066 = vpack.c.b16 %v1674, %v1672
    %v2067 = vpack.c.b16 %v1675, %v1673
    %v2068 = vpack.c.b16 %v1678, %v1676
    %v2069 = vpack.c.b16 %v1679, %v1677
    %v2070 = vpack.c.b16 %v1682, %v1680
    %v2071 = vpack.c.b16 %v1683, %v1681
    %v2072 = vpack.c.b16 %v1686, %v1684
    %v2073 = vpack.c.b16 %v1687, %v1685
    %v2074 = vpack.c.b16 %v1690, %v1688
    %v2075 = vpack.c.b16 %v1691, %v1689
    %2460 = vmatprep.subr.bf16.mxu0 %v1693
    %2461 = vmatpush1.bf16.msra.mxu0 %v1692
    %2462 = vmatprep.subr.bf16.mxu0 %v1695
    %2463 = vmatpush1.bf16.msra.mxu0 %v1694
    %2464 = vmatprep.subr.bf16.mxu0 %v1697
    %2465 = vmatpush1.bf16.msra.mxu0 %v1696
    %2466 = vmatprep.subr.bf16.mxu0 %v1699
    %2467 = vmatpush1.bf16.msra.mxu0 %v1698
    %2468 = vmatprep.subr.bf16.mxu0 %v1701
    %2469 = vmatpush1.bf16.msra.mxu0 %v1700
    %2470 = vmatprep.subr.bf16.mxu0 %v1703
    %2471 = vmatpush1.bf16.msra.mxu0 %v1702
    %2472 = vmatprep.subr.bf16.mxu0 %v1705
    %2473 = vmatpush1.bf16.msra.mxu0 %v1704
    %2474 = vmatprep.subr.bf16.mxu0 %v1707
    %2475 = vmatpush1.bf16.msra.mxu0 %v1706
    %2476 = vmatprep.subr.bf16.mxu0 %v1709
    %2477 = vmatpush1.bf16.msra.mxu0 %v1708
    %2478 = vmatprep.subr.bf16.mxu0 %v1711
    %2479 = vmatpush1.bf16.msra.mxu0 %v1710
    %2480 = vmatprep.subr.bf16.mxu0 %v1713
    %2481 = vmatpush1.bf16.msra.mxu0 %v1712
    %2482 = vmatprep.subr.bf16.mxu0 %v1715
    %2483 = vmatpush1.bf16.msra.mxu0 %v1714
    %2484 = vmatprep.subr.bf16.mxu0 %v1717
    %2485 = vmatpush1.bf16.msra.mxu0 %v1716
    %2486 = vmatprep.subr.bf16.mxu0 %v1719
    %2487 = vmatpush1.bf16.msra.mxu0 %v1718
    %2488 = vmatprep.subr.bf16.mxu0 %v1721
    %2489 = vmatpush1.bf16.msra.mxu0 %v1720
    %2490 = vmatprep.subr.bf16.mxu0 %v1723
    %2491 = vmatpush1.bf16.msra.mxu0 %v1722
    %2492 = vmatprep.mubr.bf16.mxu0 %v493
    %2493 = vmatmul.mubr.bf16.gmra.mrb[0].mxu0 %v492
    %v2494 = vpop.f32.mrb[0].mxu0
    %v2495 = vadd.f32 0.0, %v2494
    %v2496 = vpop.f32.mrb[0].mxu0
    %v2497 = vadd.f32 0.0, %v2496
    %v2498 = vpop.f32.mrb[0].mxu0
    %v2499 = vpop.f32.mrb[0].mxu0
    %2500 = vdwg.mxu0
    %2501 = vmatprep.subr.bf16.mxu0 %v1725
    %2502 = vmatpush1.bf16.msra.mxu0 %v1724
    %2503 = vmatprep.subr.bf16.mxu0 %v1727
    %2504 = vmatpush1.bf16.msra.mxu0 %v1726
    %2505 = vmatprep.subr.bf16.mxu0 %v1729
    %2506 = vmatpush1.bf16.msra.mxu0 %v1728
    %2507 = vmatprep.subr.bf16.mxu0 %v1731
    %2508 = vmatpush1.bf16.msra.mxu0 %v1730
    %2509 = vmatprep.subr.bf16.mxu0 %v1733
    %2510 = vmatpush1.bf16.msra.mxu0 %v1732
    %2511 = vmatprep.subr.bf16.mxu0 %v1735
    %2512 = vmatpush1.bf16.msra.mxu0 %v1734
    %2513 = vmatprep.subr.bf16.mxu0 %v1737
    %2514 = vmatpush1.bf16.msra.mxu0 %v1736
    %2515 = vmatprep.subr.bf16.mxu0 %v1739
    %2516 = vmatpush1.bf16.msra.mxu0 %v1738
    %2517 = vmatprep.subr.bf16.mxu0 %v1741
    %2518 = vmatpush1.bf16.msra.mxu0 %v1740
    %2519 = vmatprep.subr.bf16.mxu0 %v1743
    %2520 = vmatpush1.bf16.msra.mxu0 %v1742
    %2521 = vmatprep.subr.bf16.mxu0 %v1745
    %2522 = vmatpush1.bf16.msra.mxu0 %v1744
    %2523 = vmatprep.subr.bf16.mxu0 %v1747
    %2524 = vmatpush1.bf16.msra.mxu0 %v1746
    %2525 = vmatprep.subr.bf16.mxu0 %v1749
    %2526 = vmatpush1.bf16.msra.mxu0 %v1748
    %2527 = vmatprep.subr.bf16.mxu0 %v1751
    %2528 = vmatpush1.bf16.msra.mxu0 %v1750
    %2529 = vmatprep.subr.bf16.mxu0 %v1753
    %2530 = vmatpush1.bf16.msra.mxu0 %v1752
    %2531 = vmatprep.subr.bf16.mxu0 %v1755
    %2532 = vmatpush1.bf16.msra.mxu0 %v1754
    %2533 = vmatprep.mubr.bf16.mxu0 %v495
    %2534 = vmatmul.mubr.bf16.gmra.mrb[0].mxu0 %v494
    %v2535 = vpop.f32.mrb[0].mxu0
    %v2536 = vadd.f32 %v2495, %v2535
    %v2537 = vpop.f32.mrb[0].mxu0
    %v2538 = vadd.f32 %v2497, %v2537
    %v2539 = vpop.f32.mrb[0].mxu0
    %v2540 = vpop.f32.mrb[0].mxu0
    %2541 = vdwg.mxu0
    %2542 = vmatprep.subr.bf16.mxu0 %v1757
    %2543 = vmatpush1.bf16.msra.mxu0 %v1756
    %2544 = vmatprep.subr.bf16.mxu0 %v1759
    %2545 = vmatpush1.bf16.msra.mxu0 %v1758
    %2546 = vmatprep.subr.bf16.mxu0 %v1761
    %2547 = vmatpush1.bf16.msra.mxu0 %v1760
    %2548 = vmatprep.subr.bf16.mxu0 %v1763
    %2549 = vmatpush1.bf16.msra.mxu0 %v1762
    %2550 = vmatprep.subr.bf16.mxu0 %v1765
    %2551 = vmatpush1.bf16.msra.mxu0 %v1764
    %2552 = vmatprep.subr.bf16.mxu0 %v1767
    %2553 = vmatpush1.bf16.msra.mxu0 %v1766
    %2554 = vmatprep.subr.bf16.mxu0 %v1769
    %2555 = vmatpush1.bf16.msra.mxu0 %v1768
    %2556 = vmatprep.subr.bf16.mxu0 %v1771
    %2557 = vmatpush1.bf16.msra.mxu0 %v1770
    %2558 = vmatprep.subr.bf16.mxu0 %v1773
    %2559 = vmatpush1.bf16.msra.mxu0 %v1772
    %2560 = vmatprep.subr.bf16.mxu0 %v1775
    %2561 = vmatpush1.bf16.msra.mxu0 %v1774
    %2562 = vmatprep.subr.bf16.mxu0 %v1777
    %2563 = vmatpush1.bf16.msra.mxu0 %v1776
    %2564 = vmatprep.subr.bf16.mxu0 %v1779
    %2565 = vmatpush1.bf16.msra.mxu0 %v1778
    %2566 = vmatprep.subr.bf16.mxu0 %v1781
    %2567 = vmatpush1.bf16.msra.mxu0 %v1780
    %2568 = vmatprep.subr.bf16.mxu0 %v1783
    %2569 = vmatpush1.bf16.msra.mxu0 %v1782
    %2570 = vmatprep.subr.bf16.mxu0 %v1785
    %2571 = vmatpush1.bf16.msra.mxu0 %v1784
    %2572 = vmatprep.subr.bf16.mxu0 %v1787
    %2573 = vmatpush1.bf16.msra.mxu0 %v1786
    %2574 = vmatprep.mubr.bf16.mxu0 %v497
    %2575 = vmatmul.mubr.bf16.gmra.mrb[0].mxu0 %v496
    %v2576 = vpop.f32.mrb[0].mxu0
    %v2577 = vadd.f32 %v2536, %v2576
    %v2578 = vpop.f32.mrb[0].mxu0
    %v2579 = vadd.f32 %v2538, %v2578
    %v2580 = vpop.f32.mrb[0].mxu0
    %v2581 = vpop.f32.mrb[0].mxu0
    %2582 = vdwg.mxu0
    %2583 = vmatprep.subr.bf16.mxu0 %v1789
    %2584 = vmatpush1.bf16.msra.mxu0 %v1788
    %2585 = vmatprep.subr.bf16.mxu0 %v1791
    %2586 = vmatpush1.bf16.msra.mxu0 %v1790
    %2587 = vmatprep.subr.bf16.mxu0 %v1793
    %2588 = vmatpush1.bf16.msra.mxu0 %v1792
    %2589 = vmatprep.subr.bf16.mxu0 %v1795
    %2590 = vmatpush1.bf16.msra.mxu0 %v1794
    %2591 = vmatprep.subr.bf16.mxu0 %v1797
    %2592 = vmatpush1.bf16.msra.mxu0 %v1796
    %2593 = vmatprep.subr.bf16.mxu0 %v1799
    %2594 = vmatpush1.bf16.msra.mxu0 %v1798
    %2595 = vmatprep.subr.bf16.mxu0 %v1801
    %2596 = vmatpush1.bf16.msra.mxu0 %v1800
    %2597 = vmatprep.subr.bf16.mxu0 %v1803
    %2598 = vmatpush1.bf16.msra.mxu0 %v1802
    %2599 = vmatprep.subr.bf16.mxu0 %v1805
    %2600 = vmatpush1.bf16.msra.mxu0 %v1804
    %2601 = vmatprep.subr.bf16.mxu0 %v1807
    %2602 = vmatpush1.bf16.msra.mxu0 %v1806
    %2603 = vmatprep.subr.bf16.mxu0 %v1809
    %2604 = vmatpush1.bf16.msra.mxu0 %v1808
    %2605 = vmatprep.subr.bf16.mxu0 %v1811
    %2606 = vmatpush1.bf16.msra.mxu0 %v1810
    %2607 = vmatprep.subr.bf16.mxu0 %v1813
    %2608 = vmatpush1.bf16.msra.mxu0 %v1812
    %2609 = vmatprep.subr.bf16.mxu0 %v1815
    %2610 = vmatpush1.bf16.msra.mxu0 %v1814
    %2611 = vmatprep.subr.bf16.mxu0 %v1817
    %2612 = vmatpush1.bf16.msra.mxu0 %v1816
    %2613 = vmatprep.subr.bf16.mxu0 %v1819
    %2614 = vmatpush1.bf16.msra.mxu0 %v1818
    %2615 = vmatprep.mubr.bf16.mxu0 %v499
    %2616 = vmatmul.mubr.bf16.gmra.mrb[0].mxu0 %v498
    %v2617 = vpop.f32.mrb[0].mxu0
    %v2618 = vadd.f32 %v2577, %v2617
    %v2619 = vpop.f32.mrb[0].mxu0
    %v2620 = vadd.f32 %v2579, %v2619
    %v2621 = vpop.f32.mrb[0].mxu0
    %v2622 = vpop.f32.mrb[0].mxu0
    %2623 = vdwg.mxu0
    %2624 = vmatprep.subr.bf16.mxu0 %v1821
    %2625 = vmatpush1.bf16.msra.mxu0 %v1820
    %2626 = vmatprep.subr.bf16.mxu0 %v1823
    %2627 = vmatpush1.bf16.msra.mxu0 %v1822
    %2628 = vmatprep.subr.bf16.mxu0 %v1825
    %2629 = vmatpush1.bf16.msra.mxu0 %v1824
    %2630 = vmatprep.subr.bf16.mxu0 %v1827
    %2631 = vmatpush1.bf16.msra.mxu0 %v1826
    %2632 = vmatprep.subr.bf16.mxu0 %v1829
    %2633 = vmatpush1.bf16.msra.mxu0 %v1828
    %2634 = vmatprep.subr.bf16.mxu0 %v1831
    %2635 = vmatpush1.bf16.msra.mxu0 %v1830
    %2636 = vmatprep.subr.bf16.mxu0 %v1833
    %2637 = vmatpush1.bf16.msra.mxu0 %v1832
    %2638 = vmatprep.subr.bf16.mxu0 %v1835
    %2639 = vmatpush1.bf16.msra.mxu0 %v1834
    %2640 = vmatprep.subr.bf16.mxu0 %v1837
    %2641 = vmatpush1.bf16.msra.mxu0 %v1836
    %2642 = vmatprep.subr.bf16.mxu0 %v1839
    %2643 = vmatpush1.bf16.msra.mxu0 %v1838
    %2644 = vmatprep.subr.bf16.mxu0 %v1841
    %2645 = vmatpush1.bf16.msra.mxu0 %v1840
    %2646 = vmatprep.subr.bf16.mxu0 %v1843
    %2647 = vmatpush1.bf16.msra.mxu0 %v1842
    %2648 = vmatprep.subr.bf16.mxu0 %v1845
    %2649 = vmatpush1.bf16.msra.mxu0 %v1844
    %2650 = vmatprep.subr.bf16.mxu0 %v1847
    %2651 = vmatpush1.bf16.msra.mxu0 %v1846
    %2652 = vmatprep.subr.bf16.mxu0 %v1849
    %2653 = vmatpush1.bf16.msra.mxu0 %v1848
    %2654 = vmatprep.subr.bf16.mxu0 %v1851
    %2655 = vmatpush1.bf16.msra.mxu0 %v1850
    %2656 = vmatprep.mubr.bf16.mxu0 %v501
    %2657 = vmatmul.mubr.bf16.gmra.mrb[0].mxu0 %v500
    %v2658 = vpop.f32.mrb[0].mxu0
    %v2659 = vadd.f32 %v2618, %v2658
    %v2660 = vpop.f32.mrb[0].mxu0
    %v2661 = vadd.f32 %v2620, %v2660
    %v2662 = vpop.f32.mrb[0].mxu0
    %v2663 = vpop.f32.mrb[0].mxu0
    %2664 = vdwg.mxu0
    %2665 = vmatprep.subr.bf16.mxu0 %v1853
    %2666 = vmatpush1.bf16.msra.mxu0 %v1852
    %2667 = vmatprep.subr.bf16.mxu0 %v1855
    %2668 = vmatpush1.bf16.msra.mxu0 %v1854
    %2669 = vmatprep.subr.bf16.mxu0 %v1857
    %2670 = vmatpush1.bf16.msra.mxu0 %v1856
    %2671 = vmatprep.subr.bf16.mxu0 %v1859
    %2672 = vmatpush1.bf16.msra.mxu0 %v1858
    %2673 = vmatprep.subr.bf16.mxu0 %v1861
    %2674 = vmatpush1.bf16.msra.mxu0 %v1860
    %2675 = vmatprep.subr.bf16.mxu0 %v1863
    %2676 = vmatpush1.bf16.msra.mxu0 %v1862
    %2677 = vmatprep.subr.bf16.mxu0 %v1865
    %2678 = vmatpush1.bf16.msra.mxu0 %v1864
    %2679 = vmatprep.subr.bf16.mxu0 %v1867
    %2680 = vmatpush1.bf16.msra.mxu0 %v1866
    %2681 = vmatprep.subr.bf16.mxu0 %v1869
    %2682 = vmatpush1.bf16.msra.mxu0 %v1868
    %2683 = vmatprep.subr.bf16.mxu0 %v1871
    %2684 = vmatpush1.bf16.msra.mxu0 %v1870
    %2685 = vmatprep.subr.bf16.mxu0 %v1873
    %2686 = vmatpush1.bf16.msra.mxu0 %v1872
    %2687 = vmatprep.subr.bf16.mxu0 %v1875
    %2688 = vmatpush1.bf16.msra.mxu0 %v1874
    %2689 = vmatprep.subr.bf16.mxu0 %v1877
    %2690 = vmatpush1.bf16.msra.mxu0 %v1876
    %2691 = vmatprep.subr.bf16.mxu0 %v1879
    %2692 = vmatpush1.bf16.msra.mxu0 %v1878
    %2693 = vmatprep.subr.bf16.mxu0 %v1881
    %2694 = vmatpush1.bf16.msra.mxu0 %v1880
    %2695 = vmatprep.subr.bf16.mxu0 %v1883
    %2696 = vmatpush1.bf16.msra.mxu0 %v1882
    %2697 = vmatprep.mubr.bf16.mxu0 %v503
    %2698 = vmatmul.mubr.bf16.gmra.mrb[0].mxu0 %v502
    %v2699 = vpop.f32.mrb[0].mxu0
    %v2700 = vadd.f32 %v2659, %v2699
    %v2701 = vpop.f32.mrb[0].mxu0
    %v2702 = vadd.f32 %v2661, %v2701
    %v2703 = vpop.f32.mrb[0].mxu0
    %v2704 = vpop.f32.mrb[0].mxu0
    %2705 = vdwg.mxu0
    %2706 = vmatprep.subr.bf16.mxu0 %v1885
    %2707 = vmatpush1.bf16.msra.mxu0 %v1884
    %2708 = vmatprep.subr.bf16.mxu0 %v1887
    %2709 = vmatpush1.bf16.msra.mxu0 %v1886
    %2710 = vmatprep.subr.bf16.mxu0 %v1889
    %2711 = vmatpush1.bf16.msra.mxu0 %v1888
    %2712 = vmatprep.subr.bf16.mxu0 %v1891
    %2713 = vmatpush1.bf16.msra.mxu0 %v1890
    %2714 = vmatprep.subr.bf16.mxu0 %v1893
    %2715 = vmatpush1.bf16.msra.mxu0 %v1892
    %2716 = vmatprep.subr.bf16.mxu0 %v1895
    %2717 = vmatpush1.bf16.msra.mxu0 %v1894
    %2718 = vmatprep.subr.bf16.mxu0 %v1897
    %2719 = vmatpush1.bf16.msra.mxu0 %v1896
    %2720 = vmatprep.subr.bf16.mxu0 %v1899
    %2721 = vmatpush1.bf16.msra.mxu0 %v1898
    %2722 = vmatprep.subr.bf16.mxu0 %v1901
    %2723 = vmatpush1.bf16.msra.mxu0 %v1900
    %2724 = vmatprep.subr.bf16.mxu0 %v1903
    %2725 = vmatpush1.bf16.msra.mxu0 %v1902
    %2726 = vmatprep.subr.bf16.mxu0 %v1905
    %2727 = vmatpush1.bf16.msra.mxu0 %v1904
    %2728 = vmatprep.subr.bf16.mxu0 %v1907
    %2729 = vmatpush1.bf16.msra.mxu0 %v1906
    %2730 = vmatprep.subr.bf16.mxu0 %v1909
    %2731 = vmatpush1.bf16.msra.mxu0 %v1908
    %2732 = vmatprep.subr.bf16.mxu0 %v1911
    %2733 = vmatpush1.bf16.msra.mxu0 %v1910
    %2734 = vmatprep.subr.bf16.mxu0 %v1913
    %2735 = vmatpush1.bf16.msra.mxu0 %v1912
    %2736 = vmatprep.subr.bf16.mxu0 %v1915
    %2737 = vmatpush1.bf16.msra.mxu0 %v1914
    %2738 = vmatprep.mubr.bf16.mxu0 %v505
    %2739 = vmatmul.mubr.bf16.gmra.mrb[0].mxu0 %v504
    %v2740 = vpop.f32.mrb[0].mxu0
    %v2741 = vadd.f32 %v2700, %v2740
    %v2742 = vpop.f32.mrb[0].mxu0
    %v2743 = vadd.f32 %v2702, %v2742
    %v2744 = vpop.f32.mrb[0].mxu0
    %v2745 = vpop.f32.mrb[0].mxu0
    %2746 = vdwg.mxu0
    %2747 = vmatprep.subr.bf16.mxu0 %v1917
    %2748 = vmatpush1.bf16.msra.mxu0 %v1916
    %2749 = vmatprep.subr.bf16.mxu0 %v1919
    %2750 = vmatpush1.bf16.msra.mxu0 %v1918
    %2751 = vmatprep.subr.bf16.mxu0 %v1921
    %2752 = vmatpush1.bf16.msra.mxu0 %v1920
    %2753 = vmatprep.subr.bf16.mxu0 %v1923
    %2754 = vmatpush1.bf16.msra.mxu0 %v1922
    %2755 = vmatprep.subr.bf16.mxu0 %v1925
    %2756 = vmatpush1.bf16.msra.mxu0 %v1924
    %2757 = vmatprep.subr.bf16.mxu0 %v1927
    %2758 = vmatpush1.bf16.msra.mxu0 %v1926
    %2759 = vmatprep.subr.bf16.mxu0 %v1929
    %2760 = vmatpush1.bf16.msra.mxu0 %v1928
    %2761 = vmatprep.subr.bf16.mxu0 %v1931
    %2762 = vmatpush1.bf16.msra.mxu0 %v1930
    %2763 = vmatprep.subr.bf16.mxu0 %v1933
    %2764 = vmatpush1.bf16.msra.mxu0 %v1932
    %2765 = vmatprep.subr.bf16.mxu0 %v1935
    %2766 = vmatpush1.bf16.msra.mxu0 %v1934
    %2767 = vmatprep.subr.bf16.mxu0 %v1937
    %2768 = vmatpush1.bf16.msra.mxu0 %v1936
    %2769 = vmatprep.subr.bf16.mxu0 %v1939
    %2770 = vmatpush1.bf16.msra.mxu0 %v1938
    %2771 = vmatprep.subr.bf16.mxu0 %v1941
    %2772 = vmatpush1.bf16.msra.mxu0 %v1940
    %2773 = vmatprep.subr.bf16.mxu0 %v1943
    %2774 = vmatpush1.bf16.msra.mxu0 %v1942
    %2775 = vmatprep.subr.bf16.mxu0 %v1945
    %2776 = vmatpush1.bf16.msra.mxu0 %v1944
    %2777 = vmatprep.subr.bf16.mxu0 %v1947
    %2778 = vmatpush1.bf16.msra.mxu0 %v1946
    %2779 = vmatprep.mubr.bf16.mxu0 %v507
    %2780 = vmatmul.mubr.bf16.gmra.mrb[0].mxu0 %v506
    %v2781 = vpop.f32.mrb[0].mxu0
    %v2782 = vadd.f32 %v2741, %v2781
    %v2783 = vpop.f32.mrb[0].mxu0
    %v2784 = vadd.f32 %v2743, %v2783
    %v2785 = vpop.f32.mrb[0].mxu0
    %v2786 = vpop.f32.mrb[0].mxu0
    %2787 = vdwg.mxu0
    %2788 = vmatprep.subr.bf16.mxu0 %v1949
    %2789 = vmatpush1.bf16.msra.mxu0 %v1948
    %2790 = vmatprep.subr.bf16.mxu0 %v1951
    %2791 = vmatpush1.bf16.msra.mxu0 %v1950
    %2792 = vmatprep.subr.bf16.mxu0 %v1953
    %2793 = vmatpush1.bf16.msra.mxu0 %v1952
    %2794 = vmatprep.subr.bf16.mxu0 %v1955
    %2795 = vmatpush1.bf16.msra.mxu0 %v1954
    %2796 = vmatprep.subr.bf16.mxu0 %v1957
    %2797 = vmatpush1.bf16.msra.mxu0 %v1956
    %2798 = vmatprep.subr.bf16.mxu0 %v1959
    %2799 = vmatpush1.bf16.msra.mxu0 %v1958
    %2800 = vmatprep.subr.bf16.mxu0 %v1961
    %2801 = vmatpush1.bf16.msra.mxu0 %v1960
    %2802 = vmatprep.subr.bf16.mxu0 %v1963
    %2803 = vmatpush1.bf16.msra.mxu0 %v1962
    %2804 = vmatprep.subr.bf16.mxu0 %v1965
    %2805 = vmatpush1.bf16.msra.mxu0 %v1964
    %2806 = vmatprep.subr.bf16.mxu0 %v1967
    %2807 = vmatpush1.bf16.msra.mxu0 %v1966
    %2808 = vmatprep.subr.bf16.mxu0 %v1969
    %2809 = vmatpush1.bf16.msra.mxu0 %v1968
    %2810 = vmatprep.subr.bf16.mxu0 %v1971
    %2811 = vmatpush1.bf16.msra.mxu0 %v1970
    %2812 = vmatprep.subr.bf16.mxu0 %v1973
    %2813 = vmatpush1.bf16.msra.mxu0 %v1972
    %2814 = vmatprep.subr.bf16.mxu0 %v1975
    %2815 = vmatpush1.bf16.msra.mxu0 %v1974
    %2816 = vmatprep.subr.bf16.mxu0 %v1977
    %2817 = vmatpush1.bf16.msra.mxu0 %v1976
    %2818 = vmatprep.subr.bf16.mxu0 %v1979
    %2819 = vmatpush1.bf16.msra.mxu0 %v1978
    %2820 = vmatprep.mubr.bf16.mxu0 %v509
    %2821 = vmatmul.mubr.bf16.gmra.mrb[0].mxu0 %v508
    %v2822 = vpop.f32.mrb[0].mxu0
    %v2823 = vadd.f32 %v2782, %v2822
    %v2824 = vpop.f32.mrb[0].mxu0
    %v2825 = vadd.f32 %v2784, %v2824
    %v2826 = vpop.f32.mrb[0].mxu0
    %v2827 = vpop.f32.mrb[0].mxu0
    %2828 = vdwg.mxu0
    %2829 = vmatprep.subr.bf16.mxu0 %v1981
    %2830 = vmatpush1.bf16.msra.mxu0 %v1980
    %2831 = vmatprep.subr.bf16.mxu0 %v1983
    %2832 = vmatpush1.bf16.msra.mxu0 %v1982
    %2833 = vmatprep.subr.bf16.mxu0 %v1985
    %2834 = vmatpush1.bf16.msra.mxu0 %v1984
    %2835 = vmatprep.subr.bf16.mxu0 %v1987
    %2836 = vmatpush1.bf16.msra.mxu0 %v1986
    %2837 = vmatprep.subr.bf16.mxu0 %v1989
    %2838 = vmatpush1.bf16.msra.mxu0 %v1988
    %2839 = vmatprep.subr.bf16.mxu0 %v1991
    %2840 = vmatpush1.bf16.msra.mxu0 %v1990
    %2841 = vmatprep.subr.bf16.mxu0 %v1993
    %2842 = vmatpush1.bf16.msra.mxu0 %v1992
    %2843 = vmatprep.subr.bf16.mxu0 %v1995
    %2844 = vmatpush1.bf16.msra.mxu0 %v1994
    %2845 = vmatprep.subr.bf16.mxu0 %v1997
    %2846 = vmatpush1.bf16.msra.mxu0 %v1996
    %2847 = vmatprep.subr.bf16.mxu0 %v1999
    %2848 = vmatpush1.bf16.msra.mxu0 %v1998
    %2849 = vmatprep.subr.bf16.mxu0 %v2001
    %2850 = vmatpush1.bf16.msra.mxu0 %v2000
    %2851 = vmatprep.subr.bf16.mxu0 %v2003
    %2852 = vmatpush1.bf16.msra.mxu0 %v2002
    %2853 = vmatprep.subr.bf16.mxu0 %v2005
    %2854 = vmatpush1.bf16.msra.mxu0 %v2004
    %2855 = vmatprep.subr.bf16.mxu0 %v2007
    %2856 = vmatpush1.bf16.msra.mxu0 %v2006
    %2857 = vmatprep.subr.bf16.mxu0 %v2009
    %2858 = vmatpush1.bf16.msra.mxu0 %v2008
    %2859 = vmatprep.subr.bf16.mxu0 %v2011
    %2860 = vmatpush1.bf16.msra.mxu0 %v2010
    %2861 = vmatprep.mubr.bf16.mxu0 %v511
    %2862 = vmatmul.mubr.bf16.gmra.mrb[0].mxu0 %v510
    %v2863 = vpop.f32.mrb[0].mxu0
    %v2864 = vadd.f32 %v2823, %v2863
    %v2865 = vpop.f32.mrb[0].mxu0
    %v2866 = vadd.f32 %v2825, %v2865
    %v2867 = vpop.f32.mrb[0].mxu0
    %v2868 = vpop.f32.mrb[0].mxu0
    %2869 = vdwg.mxu0
    %2870 = vmatprep.subr.bf16.mxu0 %v2013
    %2871 = vmatpush1.bf16.msra.mxu0 %v2012
    %2872 = vmatprep.subr.bf16.mxu0 %v2015
    %2873 = vmatpush1.bf16.msra.mxu0 %v2014
    %2874 = vmatprep.subr.bf16.mxu0 %v2017
    %2875 = vmatpush1.bf16.msra.mxu0 %v2016
    %2876 = vmatprep.subr.bf16.mxu0 %v2019
    %2877 = vmatpush1.bf16.msra.mxu0 %v2018
    %2878 = vmatprep.subr.bf16.mxu0 %v2021
    %2879 = vmatpush1.bf16.msra.mxu0 %v2020
    %2880 = vmatprep.subr.bf16.mxu0 %v2023
    %2881 = vmatpush1.bf16.msra.mxu0 %v2022
    %2882 = vmatprep.subr.bf16.mxu0 %v2025
    %2883 = vmatpush1.bf16.msra.mxu0 %v2024
    %2884 = vmatprep.subr.bf16.mxu0 %v2027
    %2885 = vmatpush1.bf16.msra.mxu0 %v2026
    %2886 = vmatprep.subr.bf16.mxu0 %v2029
    %2887 = vmatpush1.bf16.msra.mxu0 %v2028
    %2888 = vmatprep.subr.bf16.mxu0 %v2031
    %2889 = vmatpush1.bf16.msra.mxu0 %v2030
    %2890 = vmatprep.subr.bf16.mxu0 %v2033
    %2891 = vmatpush1.bf16.msra.mxu0 %v2032
    %2892 = vmatprep.subr.bf16.mxu0 %v2035
    %2893 = vmatpush1.bf16.msra.mxu0 %v2034
    %2894 = vmatprep.subr.bf16.mxu0 %v2037
    %2895 = vmatpush1.bf16.msra.mxu0 %v2036
    %2896 = vmatprep.subr.bf16.mxu0 %v2039
    %2897 = vmatpush1.bf16.msra.mxu0 %v2038
    %2898 = vmatprep.subr.bf16.mxu0 %v2041
    %2899 = vmatpush1.bf16.msra.mxu0 %v2040
    %2900 = vmatprep.subr.bf16.mxu0 %v2043
    %2901 = vmatpush1.bf16.msra.mxu0 %v2042
    %2902 = vmatprep.mubr.bf16.mxu0 %v513
    %2903 = vmatmul.mubr.bf16.gmra.mrb[0].mxu0 %v512
    %v2904 = vpop.f32.mrb[0].mxu0
    %v2905 = vadd.f32 %v2864, %v2904
    %v2906 = vpop.f32.mrb[0].mxu0
    %v2907 = vadd.f32 %v2866, %v2906
    %v2908 = vpop.f32.mrb[0].mxu0
    %v2909 = vpop.f32.mrb[0].mxu0
    %2910 = vdwg.mxu0
    %2911 = vmatprep.subr.bf16.mxu0 %v2045
    %2912 = vmatpush1.bf16.msra.mxu0 %v2044
    %2913 = vmatprep.subr.bf16.mxu0 %v2047
    %2914 = vmatpush1.bf16.msra.mxu0 %v2046
    %2915 = vmatprep.subr.bf16.mxu0 %v2049
    %2916 = vmatpush1.bf16.msra.mxu0 %v2048
    %2917 = vmatprep.subr.bf16.mxu0 %v2051
    %2918 = vmatpush1.bf16.msra.mxu0 %v2050
    %2919 = vmatprep.subr.bf16.mxu0 %v2053
    %2920 = vmatpush1.bf16.msra.mxu0 %v2052
    %2921 = vmatprep.subr.bf16.mxu0 %v2055
    %2922 = vmatpush1.bf16.msra.mxu0 %v2054
    %2923 = vmatprep.subr.bf16.mxu0 %v2057
    %2924 = vmatpush1.bf16.msra.mxu0 %v2056
    %2925 = vmatprep.subr.bf16.mxu0 %v2059
    %2926 = vmatpush1.bf16.msra.mxu0 %v2058
    %2927 = vmatprep.subr.bf16.mxu0 %v2061
    %2928 = vmatpush1.bf16.msra.mxu0 %v2060
    %2929 = vmatprep.subr.bf16.mxu0 %v2063
    %2930 = vmatpush1.bf16.msra.mxu0 %v2062
    %2931 = vmatprep.subr.bf16.mxu0 %v2065
    %2932 = vmatpush1.bf16.msra.mxu0 %v2064
    %2933 = vmatprep.subr.bf16.mxu0 %v2067
    %2934 = vmatpush1.bf16.msra.mxu0 %v2066
    %2935 = vmatprep.subr.bf16.mxu0 %v2069
    %2936 = vmatpush1.bf16.msra.mxu0 %v2068
    %2937 = vmatprep.subr.bf16.mxu0 %v2071
    %2938 = vmatpush1.bf16.msra.mxu0 %v2070
    %2939 = vmatprep.subr.bf16.mxu0 %v2073
    %2940 = vmatpush1.bf16.msra.mxu0 %v2072
    %2941 = vmatprep.subr.bf16.mxu0 %v2075
    %2942 = vmatpush1.bf16.msra.mxu0 %v2074
    %2943 = vmatprep.mubr.bf16.mxu0 %v515
    %2944 = vmatmul.mubr.bf16.gmra.mrb[0].mxu0 %v514
    %v2945 = vpop.f32.mrb[0].mxu0
    %v2946 = vadd.f32 %v2905, %v2945
    %v2947 = vpop.f32.mrb[0].mxu0
    %v2948 = vadd.f32 %v2907, %v2947
    %v2949 = vpop.f32.mrb[0].mxu0
    %v2950 = vpop.f32.mrb[0].mxu0
    %2951 = vdwg.mxu0
    %v2952 = vadd.f32 %v58, %v2946
    %v2953 = vadd.f32 %v59, %v2948
    %2954 = vst [vmem:[#allocation2] sm:$0xff] %v2952
    %2955 = vst [vmem:[#allocation2 + $0x8] sm:$0xff] %v2953
    // Predicated region
    $region30: #{tpu_custom_call.1} parent=1 // pred_check
      %p2956 = pneg %p52
    $region31: #{tpu_custom_call.1} parent=1 // pred_check_branch
      %2958 = sbr.rel (%p2956) target = $region33
    $region32: #{tpu_custom_call.1} parent=1 // pred_region
      %v2959 = vld [vmem:[#allocation2] sm:$0xff]
      %v2960 = vld [vmem:[#allocation2 + $0x8] sm:$0xff]
      %v2961 = vld [vmem:[#allocation8] sm:$0x3]
      %v2963 = vlaneseq
      %v2964 = vshrl.u32 %v2963, 7
      %v2965 = vsub.s32 0, %v2964
      %v2966 = vrot.slane %v2961, %v2965
      %v2967 = vlaneseq
      %v2968 = vshrl.u32 %v2967, 7
      %v2969 = vsub.s32 1, %v2968
      %v2970 = vrot.slane %v2961, %v2969
      %v2973 = vadd.f32 %v2959, %v2966
      %v2974 = vadd.f32 %v2960, %v2970
      %v2975 = vmul.f32 %v2973, %v2973
      %v2976 = vmul.f32 %v2974, %v2974
      %v2977 = vadd.f32 %v2975, %v2976
      %2978 = vadd.xlane.f32.xlu0 %v2977
      %v2979 = vpop.xlane.xlu0 %2978
      %v2980 = vadd.f32 %v2979, 1e-12
      %v2981 = vrsqrt.pop %v2980
      %v2982 = vmul.f32 %v2973, %v2981
      %v2983 = vmul.f32 %v2974, %v2981
      %2984 = vst [vmem:[#allocation9] sm:$0xff] %v2982
      %2985 = vst [vmem:[#allocation9 + $0x8] sm:$0xff] %v2983
    $region33: #{tpu_custom_call.1} parent=1 // pred_fallthru
      _
    // Predicated region
    $region34: #{tpu_custom_call.1} parent=1 // pred_check
      _
    $region35: #{tpu_custom_call.1} parent=1 // pred_check_branch
      %2987 = sbr.rel (0) target = $region37
    $region36: #{tpu_custom_call.1} parent=1 // pred_region
      %s2989 = ssub.s32 256, 256
      %2990 = vsyncadd [#allocation5], %s2989
      %s2992 = sshll.u32 [#allocation9], 4
      %s2993 = int_to_ptr.vmem [resolvable:$true] %s2992
      %2995 = dma.vmem_to_hbm [thread:$0]  %s2993, 256, %s3, [#allocation5]
    $region37: #{tpu_custom_call.1} parent=1 // pred_fallthru
      _
    // Predicated region
    $region38: #{tpu_custom_call.1} parent=1 // pred_check
      _
    $region39: #{tpu_custom_call.1} parent=1 // pred_check_branch
      %2997 = sbr.rel (0) target = $region41
    $region40: #{tpu_custom_call.1} parent=1 // pred_region
      %2998 = dma.done [#allocation5], 256
    $region41: #{tpu_custom_call.1} parent=1 // pred_fallthru
      _
    %2999 = vsyncpa [#allocation4], 1
    %3000 = vsyncpa [#allocation7], 1
    %3001 = vsyncpa [#allocation5], 1

</llo_original>
